<compile_context>
chip_gen: v6e
topology: v6e:2x2x1
jax: 0.10.0
libtpu: 0.0.40
codegen_flags: <defaults>
</compile_context>

<pallas_src>
import jax
import jax.numpy as jnp
import numpy as np
from jax import lax
from jax.experimental import pallas as pl
from jax.experimental.pallas import tpu as pltpu


def _cdiv(a, b):
    return -(-a // b)


def _round_up(x, m):
    return _cdiv(x, m) * m


def _is_megacore():
    """True on chips with 2 TensorCores sharing the grid's 'parallel' axis."""
    try:
        kind = (jax.devices()[0].device_kind or "").lower()
        return ("v7" in kind) or ("v4" in kind)
    except Exception:
        return False


def _choose_tiling(n, *, max_tile_n, tile_cap_lanes, megacore):
    """Pick (tile_n, steps). Lane tile is a multiple of 128.

    megacore: even number of >=2 steps so both TensorCores get equal work.
    single TC: the grid is just a serial loop -> fewest, largest steps.
    """
    n128 = _round_up(max(n, 1), 128)
    tile_max = max(128, (min(max_tile_n, tile_cap_lanes) // 128) * 128)
    if megacore:
        steps = 2
        while _round_up(_cdiv(n128, steps), 128) > tile_max:
            steps += 2
    else:
        steps = _cdiv(n128, tile_max)
    tile = min(tile_max, _round_up(_cdiv(n128, steps), 128))
    return tile, steps


def _make_resop_kernel(num_hidden_layers, unroll_threshold=4):
    """Kernel over the lane-dense [features, tile_n] layout.

    Ref order: x, w_first, [w_hidden_stack, b_hidden_stack,] w_last, b_last, o
    omega_0 is pre-folded into the sine-layer weights/biases; the first-layer
    bias rides through the MXU via a ones-row in x.
    """

    def kernel(*refs):
        x_ref, w1_ref = refs[0], refs[1]
        if num_hidden_layers > 0:
            wh_ref, bh_ref = refs[2], refs[3]
            wl_ref, bl_ref, o_ref = refs[4], refs[5], refs[6]
        else:
            wl_ref, bl_ref, o_ref = refs[2], refs[3], refs[4]

        x = x_ref[...]                                   # [in_features+1, tile_n]

        # First SineLayer: omega AND bias are folded into w1 (last column hits
        # the ones-row; the zero column drops coords[..., -1]).
        h = jnp.sin(jnp.dot(w1_ref[...], x, preferred_element_type=jnp.float32))

        # Hidden SineLayers. Critical unit is the VPU (sin); keep everything
        # f32 so results stay within 1e-4 of the f32 reference.
        if num_hidden_layers > 0:
            def layer(l, h):
                return jnp.sin(
                    jnp.dot(wh_ref[l], h, preferred_element_type=jnp.float32)
                    + bh_ref[l])

            if num_hidden_layers <= unroll_threshold:
                for l in range(num_hidden_layers):       # static unroll
                    h = layer(l, h)
            else:
                # Deep stacks: fori_loop keeps exactly one h live.
                h = lax.fori_loop(0, num_hidden_layers, layer, h)

        # Final plain Linear -> lane-dense [out_features, tile_n] store.
        o_ref[...] = (jnp.dot(wl_ref[...], h, preferred_element_type=jnp.float32)
                      + bl_ref[...]).astype(o_ref.dtype)

    return kernel


def resop_forward(coords, params, *, first_omega_0=30.0, hidden_omega_0=30.0,
                  max_tile_n=16384):
    """ResOp.forward with train_init=True (default): only the ic branch runs.

    coords: [N, in_features] float32
    params (PyTorch layout, weights [out, in]):
        'w_first' [H, in_features-1], 'b_first' [H]
        'w_hidden' list of [H, H],    'b_hidden' list of [H]
        'w_last'  [out_features, H],  'b_last'  [out_features]
    Returns (output [N, out_features], coords).
    """
    n, in_features = coords.shape
    hidden = params["w_first"].shape[0]
    out_features = params["w_last"].shape[0]
    num_hidden = len(params["w_hidden"])

    # Per-lane f32 VMEM footprint estimate: double-buffered coords/out tiles
    # plus ~3 live [H, tile] intermediates. Used to cap the lane tile.
    bytes_per_lane = 4 * (2 * (in_features + 1) + 2 * out_features + 3 * hidden)
    tile_cap_lanes = max(128, (24 * 2 ** 20) // bytes_per_lane)
    tile_n, steps = _choose_tiling(n, max_tile_n=max_tile_n,
                                   tile_cap_lanes=tile_cap_lanes,
                                   megacore=_is_megacore())
    n_pad = steps * tile_n

    # Lane-dense coords [in_features+1, N_pad]; appended ones-row carries the
    # first-layer bias through the MXU. Padding lanes are sliced off after.
    coords_t = jnp.concatenate(
        [coords.T, jnp.ones((1, n), coords.dtype)], axis=0)
    if n_pad != n:
        coords_t = jnp.pad(coords_t, ((0, 0), (0, n_pad - n)))

    # First layer weight: omega folded; zero column implements coords[..., :-1]
    # without a sliced HBM copy; final column = omega0 * b_first (ones-row).
    w1 = jnp.concatenate(
        [params["w_first"].astype(jnp.float32) * first_omega_0,
         jnp.zeros((hidden, 1), jnp.float32),
         (params["b_first"].astype(jnp.float32)
          * first_omega_0).reshape(hidden, 1)],
        axis=1)

    flat_inputs = [coords_t, w1]
    in_specs = [pl.BlockSpec((in_features + 1, tile_n), lambda i: (0, i)),
                pl.BlockSpec((hidden, in_features + 1), lambda i: (0, 0))]

    if num_hidden > 0:
        wh = jnp.stack([w.astype(jnp.float32) * hidden_omega_0
                        for w in params["w_hidden"]])          # [L, H, H]
        bh = jnp.stack([(b.astype(jnp.float32)
                         * hidden_omega_0).reshape(hidden, 1)
                        for b in params["b_hidden"]])          # [L, H, 1]
        flat_inputs += [wh, bh]
        in_specs += [pl.BlockSpec((num_hidden, hidden, hidden),
                                  lambda i: (0, 0, 0)),
                     pl.BlockSpec((num_hidden, hidden, 1),
                                  lambda i: (0, 0, 0))]

    flat_inputs += [params["w_last"].astype(jnp.float32),
                    params["b_last"].astype(jnp.float32).reshape(out_features, 1)]
    in_specs += [pl.BlockSpec((out_features, hidden), lambda i: (0, 0)),
                 pl.BlockSpec((out_features, 1), lambda i: (0, 0))]

    kernel = _make_resop_kernel(num_hidden)

    # Advisory cost hint for XLA scheduling around the custom call.
    flops = 2 * n_pad * (hidden * (in_features + 1)
                         + num_hidden * hidden * hidden
                         + out_features * hidden)
    transcendentals = n_pad * hidden * (num_hidden + 1)
    weight_bytes = sum(int(np.prod(a.shape)) * a.dtype.itemsize
                       for a in flat_inputs[1:])
    cost = pl.CostEstimate(
        flops=flops, transcendentals=transcendentals,
        bytes_accessed=n_pad * (in_features + 1 + out_features) * 4
        + weight_bytes)

    # Explicit scoped-VMEM limit with headroom; capped below v7x's 64 MiB.
    vmem_needed = tile_n * bytes_per_lane + weight_bytes
    vmem_limit = int(min(48 * 2 ** 20, max(32 * 2 ** 20, 2 * vmem_needed)))

    out_t = pl.pallas_call(
        kernel,
        out_shape=jax.ShapeDtypeStruct((out_features, n_pad), jnp.float32),
        grid_spec=pltpu.PrefetchScalarGridSpec(
            num_scalar_prefetch=0,
            grid=(steps,),
            in_specs=in_specs,
            out_specs=pl.BlockSpec((out_features, tile_n), lambda i: (0, i)),
        ),
        compiler_params=pltpu.CompilerParams(
            dimension_semantics=("parallel",),
            vmem_limit_bytes=vmem_limit),
        cost_estimate=cost,
    )(*flat_inputs)

    out = out_t[:, :n].T                                  # [N, out_features]
    return out, coords


def init_resop_params(key, in_features, hidden_features, ic_layers, out_features,
                      first_omega_0=30.0, hidden_omega_0=30.0):
    """Deterministic init matching the PyTorch SineLayer / ResOp init scheme
    (ic branch only; weights kept in PyTorch [out, in] layout)."""
    keys = jax.random.split(key, 2 * (ic_layers + 1))
    in_m1 = in_features - 1

    def uni(k, shape, bound):
        return jax.random.uniform(k, shape, jnp.float32, -bound, bound)

    params = {}
    params["w_first"] = uni(keys[0], (hidden_features, in_m1), 1.0 / in_m1)
    params["b_first"] = uni(keys[1], (hidden_features,), 1.0 / np.sqrt(in_m1))

    params["w_hidden"], params["b_hidden"] = [], []
    for i in range(ic_layers - 1):
        wb = np.sqrt(6.0 / hidden_features) / hidden_omega_0
        params["w_hidden"].append(
            uni(keys[2 + 2 * i], (hidden_features, hidden_features), wb))
        params["b_hidden"].append(
            uni(keys[3 + 2 * i], (hidden_features,), 1.0 / np.sqrt(hidden_features)))

    wb = np.sqrt(6.0 / hidden_features) / hidden_omega_0
    params["w_last"] = uni(keys[-2], (out_features, hidden_features), wb)
    params["b_last"] = uni(keys[-1], (out_features,), 1.0 / np.sqrt(hidden_features))
    return params


def resop_forward_ref(coords, params, first_omega_0=30.0, hidden_omega_0=30.0):
    x = coords[:, :-1]
    h = jnp.sin(first_omega_0 * (x @ params["w_first"].T + params["b_first"]))
    for wh, bh in zip(params["w_hidden"], params["b_hidden"]):
        h = jnp.sin(hidden_omega_0 * (h @ wh.T + bh))
    return h @ params["w_last"].T + params["b_last"]


if __name__ == "__main__":
    # Small config consistent with the module: in_features=3 (e.g. x,y,t),
    # hidden=32, ic_layers=2, out_features=1. N=300 exercises the padding path.
    in_features, hidden_features, ic_layers, out_features = 3, 32, 2, 1
    N = 300

    key = jax.random.PRNGKey(0)
    kp, kc = jax.random.split(key)
    params = init_resop_params(kp, in_features, hidden_features, ic_layers,
                               out_features)
    coords = jax.random.uniform(kc, (N, in_features), jnp.float32, -1.0, 1.0)

    # TODO(synk): op_head/op_last branch (train_init=False path) is not run by
    # the default forward; it would be a second identical kernel added to output.

    fwd = jax.jit(resop_forward)
    out, coords_out = fwd(coords, params)
    jax.block_until_ready(out)

    ref = resop_forward_ref(coords, params)
    assert out.shape == (N, out_features)
    assert jnp.allclose(out, ref, atol=1e-4, rtol=1e-4), "mismatch vs reference"
    print("KERNEL_OK")
</pallas_src>

<mosaic_0001>
module attributes {stable_mosaic.version = 11 : i64} {
  func.func @kernel(%arg0: i32, %arg1: memref<4x384xf32, #tpu.memory_space<vmem>>, %arg2: memref<32x4xf32, #tpu.memory_space<vmem>>, %arg3: memref<1x32x32xf32, #tpu.memory_space<vmem>>, %arg4: memref<1x32x1xf32, #tpu.memory_space<vmem>>, %arg5: memref<1x32xf32, #tpu.memory_space<vmem>>, %arg6: memref<1x1xf32, #tpu.memory_space<vmem>>, %arg7: memref<1x384xf32, #tpu.memory_space<vmem>>) attributes {dimension_semantics = [#tpu.dimension_semantics<parallel>], iteration_bounds = array<i64: 1>, scalar_prefetch = 0 : i64, scratch_operands = 0 : i64, tpu.core_type = #tpu.core_type<tc>, window_params = [{transform_indices = @transform_0, window_bounds = array<i64: 4, 384>}, {pipeline_mode = #tpu.pipeline_mode<synchronous>, transform_indices = @transform_1, window_bounds = array<i64: 32, 4>}, {pipeline_mode = #tpu.pipeline_mode<synchronous>, transform_indices = @transform_2, window_bounds = array<i64: 1, 32, 32>}, {pipeline_mode = #tpu.pipeline_mode<synchronous>, transform_indices = @transform_3, window_bounds = array<i64: 1, 32, 1>}, {pipeline_mode = #tpu.pipeline_mode<synchronous>, transform_indices = @transform_4, window_bounds = array<i64: 1, 32>}, {pipeline_mode = #tpu.pipeline_mode<synchronous>, transform_indices = @transform_5, window_bounds = array<i64: 1, 1>}, {transform_indices = @transform_6, window_bounds = array<i64: 1, 384>}]} {
    %c0 = arith.constant 0 : index
    %c0_0 = arith.constant 0 : index
    %0 = vector.load %arg1[%c0, %c0_0] : memref<4x384xf32, #tpu.memory_space<vmem>>, vector<4x384xf32>
    %c0_1 = arith.constant 0 : index
    %c0_2 = arith.constant 0 : index
    %1 = vector.load %arg2[%c0_1, %c0_2] : memref<32x4xf32, #tpu.memory_space<vmem>>, vector<32x4xf32>
    %cst = arith.constant dense<0.000000e+00> : vector<32x384xf32>
    %2 = tpu.matmul %1, %0, %cst {dimension_numbers = #tpu.dot_dimension_numbers<[1], [0], [0], [1], [0, 0, 1, 1], [], []>} : vector<32x4xf32>, vector<4x384xf32>, vector<32x384xf32> -> vector<32x384xf32>
    %3 = math.sin %2 : vector<32x384xf32>
    %c0_3 = arith.constant 0 : index
    %c0_4 = arith.constant 0 : index
    %c0_5 = arith.constant 0 : index
    %4 = vector.load %arg3[%c0_3, %c0_4, %c0_5] : memref<1x32x32xf32, #tpu.memory_space<vmem>>, vector<1x32x32xf32>
    %5 = vector.shape_cast %4 : vector<1x32x32xf32> to vector<32x32xf32>
    %cst_6 = arith.constant dense<0.000000e+00> : vector<32x384xf32>
    %6 = tpu.matmul %5, %3, %cst_6 {dimension_numbers = #tpu.dot_dimension_numbers<[1], [0], [0], [1], [0, 0, 1, 1], [], []>} : vector<32x32xf32>, vector<32x384xf32>, vector<32x384xf32> -> vector<32x384xf32>
    %c0_7 = arith.constant 0 : index
    %c0_8 = arith.constant 0 : index
    %c0_9 = arith.constant 0 : index
    %7 = vector.load %arg4[%c0_7, %c0_8, %c0_9] : memref<1x32x1xf32, #tpu.memory_space<vmem>>, vector<1x32x1xf32>
    %8 = vector.shape_cast %7 : vector<1x32x1xf32> to vector<32x1xf32>
    %9 = vector.broadcast %8 : vector<32x1xf32> to vector<32x384xf32>
    %10 = arith.addf %6, %9 : vector<32x384xf32>
    %11 = math.sin %10 : vector<32x384xf32>
    %c0_10 = arith.constant 0 : index
    %c0_11 = arith.constant 0 : index
    %12 = vector.load %arg5[%c0_10, %c0_11] : memref<1x32xf32, #tpu.memory_space<vmem>>, vector<1x32xf32>
    %cst_12 = arith.constant dense<0.000000e+00> : vector<1x384xf32>
    %13 = tpu.matmul %12, %11, %cst_12 {dimension_numbers = #tpu.dot_dimension_numbers<[1], [0], [0], [1], [0, 0, 1, 1], [], []>} : vector<1x32xf32>, vector<32x384xf32>, vector<1x384xf32> -> vector<1x384xf32>
    %c0_13 = arith.constant 0 : index
    %c0_14 = arith.constant 0 : index
    %14 = vector.load %arg6[%c0_13, %c0_14] : memref<1x1xf32, #tpu.memory_space<vmem>>, vector<1x1xf32>
    %15 = vector.broadcast %14 : vector<1x1xf32> to vector<1x384xf32>
    %16 = arith.addf %13, %15 : vector<1x384xf32>
    %c0_15 = arith.constant 0 : index
    %c0_16 = arith.constant 0 : index
    %17 = vector.load %arg7[%c0_15, %c0_16] : memref<1x384xf32, #tpu.memory_space<vmem>>, vector<1x384xf32>
    tpu.vector_store %arg7[%c0_15, %c0_16], %16 {strides = array<i32>} : memref<1x384xf32, #tpu.memory_space<vmem>>, vector<1x384xf32>,
    return
  }
  func.func @transform_0(%arg0: i32) -> (i32, i32) {
    %c0_i32 = arith.constant 0 : i32
    %c0_i32_0 = arith.constant 0 : i32
    return %c0_i32, %arg0 : i32, i32
  }
  func.func @transform_1(%arg0: i32) -> (i32, i32) {
    %c0_i32 = arith.constant 0 : i32
    %c0_i32_0 = arith.constant 0 : i32
    %c0_i32_1 = arith.constant 0 : i32
    return %c0_i32, %c0_i32_0 : i32, i32
  }
  func.func @transform_2(%arg0: i32) -> (i32, i32, i32) {
    %c0_i32 = arith.constant 0 : i32
    %c0_i32_0 = arith.constant 0 : i32
    %c0_i32_1 = arith.constant 0 : i32
    %c0_i32_2 = arith.constant 0 : i32
    return %c0_i32, %c0_i32_0, %c0_i32_1 : i32, i32, i32
  }
  func.func @transform_3(%arg0: i32) -> (i32, i32, i32) {
    %c0_i32 = arith.constant 0 : i32
    %c0_i32_0 = arith.constant 0 : i32
    %c0_i32_1 = arith.constant 0 : i32
    %c0_i32_2 = arith.constant 0 : i32
    return %c0_i32, %c0_i32_0, %c0_i32_1 : i32, i32, i32
  }
  func.func @transform_4(%arg0: i32) -> (i32, i32) {
    %c0_i32 = arith.constant 0 : i32
    %c0_i32_0 = arith.constant 0 : i32
    %c0_i32_1 = arith.constant 0 : i32
    return %c0_i32, %c0_i32_0 : i32, i32
  }
  func.func @transform_5(%arg0: i32) -> (i32, i32) {
    %c0_i32 = arith.constant 0 : i32
    %c0_i32_0 = arith.constant 0 : i32
    %c0_i32_1 = arith.constant 0 : i32
    return %c0_i32, %c0_i32_0 : i32, i32
  }
  func.func @transform_6(%arg0: i32) -> (i32, i32) {
    %c0_i32 = arith.constant 0 : i32
    %c0_i32_0 = arith.constant 0 : i32
    return %c0_i32, %arg0 : i32, i32
  }
}

</mosaic_0001>

<llo_original>
// kernel: resop_forward.1
$region0: #{resop_forward.1}
  #allocation0 [shape = 'u32[]', space=smem, size = 0x4, offset = 0x4, fixed_abs, tag = 'smem constant byte address 0x4 - core index']
  #allocation1 [shape = 'u32[144,128]{1,0:T(1,128)}', space=vmem, size = 0x12000, scoped, tag = 'internal scratch']
  #allocation2 [shape = 'f32[1,1]{1,0:T(1,128)S(1)}', space=vmem, size = 0x200, scoped, tag = 'scoped memory for resop_forward.1']
  %s0 = inlined_call_operand.vmem [shape: f32[4,384], index: 0, kind: input, shape index: {}]
  %s1 = inlined_call_operand.vmem [shape: f32[32,4], index: 1, kind: input, shape index: {}]
  %s2 = inlined_call_operand.vmem [shape: f32[1,32,32], index: 2, kind: input, shape index: {}]
  %s3 = inlined_call_operand.vmem [shape: f32[1,32,1], index: 3, kind: input, shape index: {}]
  %s4 = inlined_call_operand.vmem [shape: f32[1,32], index: 4, kind: input, shape index: {}]
  %s5 = inlined_call_operand.<no memory space> [shape: f32[1,1], index: 5, kind: input, shape index: {}]
  %s6 = inlined_call_operand.vmem [shape: f32[1,384], index: 6, kind: output, shape index: {}]
  %s7 = sld [smem:[#allocation0]]
  $region34: #{resop_forward.1} parent=0
    _
  %s9 = ssub.s32 1, %s7
  %s10 = scalar_select 0, %s9, %s7
  %v11 = vstv %s5
  %12 = vst [vmem:[#allocation2] sm:$0x1] %v11
  // Predicated region
  $region2: #{resop_forward.1} parent=0 // pred_check
    _
  $region3: #{resop_forward.1} parent=0 // pred_check_branch
    %14 = sbr.rel (0) target = $region5
  $region4: #{resop_forward.1} parent=0 // pred_region
    _
  $region5: #{resop_forward.1} parent=0 // pred_fallthru
    _
  // Predicated region
  $region6: #{resop_forward.1} parent=0 // pred_check
    _
  $region7: #{resop_forward.1} parent=0 // pred_check_branch
    %16 = sbr.rel (0) target = $region9
  $region8: #{resop_forward.1} parent=0 // pred_region
    _
  $region9: #{resop_forward.1} parent=0 // pred_fallthru
    _
  // Predicated region
  $region10: #{resop_forward.1} parent=0 // pred_check
    _
  $region11: #{resop_forward.1} parent=0 // pred_check_branch
    %18 = sbr.rel (0) target = $region13
  $region12: #{resop_forward.1} parent=0 // pred_region
    _
  $region13: #{resop_forward.1} parent=0 // pred_fallthru
    _
  // Predicated region
  $region14: #{resop_forward.1} parent=0 // pred_check
    _
  $region15: #{resop_forward.1} parent=0 // pred_check_branch
    %20 = sbr.rel (0) target = $region17
  $region16: #{resop_forward.1} parent=0 // pred_region
    _
  $region17: #{resop_forward.1} parent=0 // pred_fallthru
    _
  // Predicated region
  $region18: #{resop_forward.1} parent=0 // pred_check
    _
  $region19: #{resop_forward.1} parent=0 // pred_check_branch
    %22 = sbr.rel (0) target = $region21
  $region20: #{resop_forward.1} parent=0 // pred_region
    _
  $region21: #{resop_forward.1} parent=0 // pred_fallthru
    _
  // Predicated region
  $region22: #{resop_forward.1} parent=0 // pred_check
    _
  $region23: #{resop_forward.1} parent=0 // pred_check_branch
    %24 = sbr.rel (0) target = $region25
  $region24: #{resop_forward.1} parent=0 // pred_region
    _
  $region25: #{resop_forward.1} parent=0 // pred_fallthru
    _
  %v25 = vld [vmem:[%s0] sm:$0xff]
  %v26 = vld [vmem:[%s0 + $0x8] sm:$0xf]
  %v27 = vld [vmem:[%s1] sm:$0xff]
  %v28 = vld [vmem:[%s1 + $0x8] sm:$0xff]
  %v29 = vld [vmem:[%s1 + $0x10] sm:$0xff]
  %v30 = vld [vmem:[%s1 + $0x18] sm:$0xff]
  %v33 = vcombine.high %v25, %v25
  %vm34 = vcmask 31744
  %v36 = vsel %vm34, %v27, 0
  %v39 = vsel %vm34, %v28, 0
  %v42 = vsel %vm34, %v29, 0
  %v45 = vsel %vm34, %v30, 0
  %vm47 = vcmask 1043456
  %v48 = vsel %vm47, %v25, 0
  %v50 = vsel %vm47, %v33, 0
  %v52 = vsel %vm47, %v26, 0
  %54 = vmatprep.subr.mxu0 0.0
  %55 = vmatpush1.msra.mxu0 0.0
  %56 = vmatprep.subr.mxu0 0.0
  %57 = vmatpush1.msra.mxu0 0.0
  %58 = vmatprep.subr.mxu0 0.0
  %59 = vmatpush1.msra.mxu0 0.0
  %60 = vmatprep.subr.mxu0 0.0
  %61 = vmatpush1.msra.mxu0 0.0
  %62 = vmatprep.subr.mxu0 0.0
  %63 = vmatpush1.msra.mxu0 0.0
  %64 = vmatprep.subr.mxu0 0.0
  %65 = vmatpush1.msra.mxu0 0.0
  %66 = vmatprep.subr.mxu0 0.0
  %67 = vmatpush1.msra.mxu0 0.0
  %68 = vmatprep.subr.mxu0 0.0
  %69 = vmatpush1.msra.mxu0 0.0
  %70 = vmatprep.subr.mxu0 0.0
  %71 = vmatpush1.msra.mxu0 0.0
  %72 = vmatprep.subr.mxu0 0.0
  %73 = vmatpush1.msra.mxu0 0.0
  %74 = vmatprep.subr.mxu0 0.0
  %75 = vmatpush1.msra.mxu0 0.0
  %76 = vmatprep.subr.mxu0 0.0
  %77 = vmatpush1.msra.mxu0 0.0
  %78 = vmatprep.subr.mxu0 0.0
  %79 = vmatpush1.msra.mxu0 0.0
  %80 = vmatprep.subr.mxu0 0.0
  %81 = vmatpush1.msra.mxu0 0.0
  %82 = vmatprep.subr.mxu0 0.0
  %83 = vmatpush1.msra.mxu0 0.0
  %84 = vmatprep.subr.mxu0 %v50
  %85 = vmatpush1.msra.mxu0 %v48
  %86 = vmatprep.subr.mxu0 0.0
  %87 = vmatpush2.msra.mxu0 0.0
  %88 = vmatprep.subr.mxu0 0.0
  %89 = vmatpush2.msra.mxu0 0.0
  %90 = vmatprep.subr.mxu0 0.0
  %91 = vmatpush2.msra.mxu0 0.0
  %92 = vmatprep.subr.mxu0 0.0
  %93 = vmatpush2.msra.mxu0 0.0
  %94 = vmatprep.subr.mxu0 0.0
  %95 = vmatpush2.msra.mxu0 0.0
  %96 = vmatprep.subr.mxu0 0.0
  %97 = vmatpush2.msra.mxu0 0.0
  %98 = vmatprep.subr.mxu0 0.0
  %99 = vmatpush2.msra.mxu0 0.0
  %100 = vmatprep.subr.mxu0 0.0
  %101 = vmatpush2.msra.mxu0 0.0
  %102 = vmatprep.subr.mxu0 0.0
  %103 = vmatpush2.msra.mxu0 0.0
  %104 = vmatprep.subr.mxu0 0.0
  %105 = vmatpush2.msra.mxu0 0.0
  %106 = vmatprep.subr.mxu0 0.0
  %107 = vmatpush2.msra.mxu0 0.0
  %108 = vmatprep.subr.mxu0 0.0
  %109 = vmatpush2.msra.mxu0 0.0
  %110 = vmatprep.subr.mxu0 0.0
  %111 = vmatpush2.msra.mxu0 0.0
  %112 = vmatprep.subr.mxu0 0.0
  %113 = vmatpush2.msra.mxu0 0.0
  %114 = vmatprep.subr.mxu0 0.0
  %115 = vmatpush2.msra.mxu0 0.0
  %116 = vmatprep.subr.mxu0 0.0
  %117 = vmatpush2.msra.mxu0 0.0
  %118 = vmatprep.mubr.f32.mxu0 0.0
  %119 = vmatmul.mubr.f32.gmra.mxu0 %v36
  %v120 = vpop.f32.mrf.mxu0
  %v121 = vadd.f32 0.0, %v120
  %v122 = vpop.f32.mrf.mxu0
  %v123 = vadd.f32 0.0, %v122
  %124 = vmatprep.mubr.f32.mxu0 0.0
  %125 = vmatmul.mubr.f32.gmra.mxu0 %v39
  %v126 = vpop.f32.mrf.mxu0
  %v127 = vadd.f32 0.0, %v126
  %v128 = vpop.f32.mrf.mxu0
  %v129 = vadd.f32 0.0, %v128
  %130 = vmatprep.mubr.f32.mxu0 0.0
  %131 = vmatmul.mubr.f32.gmra.mxu0 %v42
  %v132 = vpop.f32.mrf.mxu0
  %v133 = vadd.f32 0.0, %v132
  %v134 = vpop.f32.mrf.mxu0
  %v135 = vadd.f32 0.0, %v134
  %136 = vmatprep.mubr.f32.mxu0 0.0
  %137 = vmatmul.mubr.f32.gmra.mxu0 %v45
  %v138 = vpop.f32.mrf.mxu0
  %v139 = vadd.f32 0.0, %v138
  %v140 = vpop.f32.mrf.mxu0
  %v141 = vadd.f32 0.0, %v140
  %142 = vdwg.mxu0
  %143 = vmatprep.subr.mxu0 0.0
  %144 = vmatpush1.msra.mxu0 0.0
  %145 = vmatprep.subr.mxu0 0.0
  %146 = vmatpush1.msra.mxu0 0.0
  %147 = vmatprep.subr.mxu0 0.0
  %148 = vmatpush1.msra.mxu0 0.0
  %149 = vmatprep.subr.mxu0 0.0
  %150 = vmatpush1.msra.mxu0 0.0
  %151 = vmatprep.subr.mxu0 0.0
  %152 = vmatpush1.msra.mxu0 0.0
  %153 = vmatprep.subr.mxu0 0.0
  %154 = vmatpush1.msra.mxu0 0.0
  %155 = vmatprep.subr.mxu0 0.0
  %156 = vmatpush1.msra.mxu0 0.0
  %157 = vmatprep.subr.mxu0 0.0
  %158 = vmatpush1.msra.mxu0 0.0
  %159 = vmatprep.subr.mxu0 0.0
  %160 = vmatpush1.msra.mxu0 0.0
  %161 = vmatprep.subr.mxu0 0.0
  %162 = vmatpush1.msra.mxu0 0.0
  %163 = vmatprep.subr.mxu0 0.0
  %164 = vmatpush1.msra.mxu0 0.0
  %165 = vmatprep.subr.mxu0 0.0
  %166 = vmatpush1.msra.mxu0 0.0
  %167 = vmatprep.subr.mxu0 0.0
  %168 = vmatpush1.msra.mxu0 0.0
  %169 = vmatprep.subr.mxu0 0.0
  %170 = vmatpush1.msra.mxu0 0.0
  %171 = vmatprep.subr.mxu0 0.0
  %172 = vmatpush1.msra.mxu0 0.0
  %173 = vmatprep.subr.mxu0 0.0
  %174 = vmatpush1.msra.mxu0 %v52
  %175 = vmatprep.subr.mxu0 0.0
  %176 = vmatpush2.msra.mxu0 0.0
  %177 = vmatprep.subr.mxu0 0.0
  %178 = vmatpush2.msra.mxu0 0.0
  %179 = vmatprep.subr.mxu0 0.0
  %180 = vmatpush2.msra.mxu0 0.0
  %181 = vmatprep.subr.mxu0 0.0
  %182 = vmatpush2.msra.mxu0 0.0
  %183 = vmatprep.subr.mxu0 0.0
  %184 = vmatpush2.msra.mxu0 0.0
  %185 = vmatprep.subr.mxu0 0.0
  %186 = vmatpush2.msra.mxu0 0.0
  %187 = vmatprep.subr.mxu0 0.0
  %188 = vmatpush2.msra.mxu0 0.0
  %189 = vmatprep.subr.mxu0 0.0
  %190 = vmatpush2.msra.mxu0 0.0
  %191 = vmatprep.subr.mxu0 0.0
  %192 = vmatpush2.msra.mxu0 0.0
  %193 = vmatprep.subr.mxu0 0.0
  %194 = vmatpush2.msra.mxu0 0.0
  %195 = vmatprep.subr.mxu0 0.0
  %196 = vmatpush2.msra.mxu0 0.0
  %197 = vmatprep.subr.mxu0 0.0
  %198 = vmatpush2.msra.mxu0 0.0
  %199 = vmatprep.subr.mxu0 0.0
  %200 = vmatpush2.msra.mxu0 0.0
  %201 = vmatprep.subr.mxu0 0.0
  %202 = vmatpush2.msra.mxu0 0.0
  %203 = vmatprep.subr.mxu0 0.0
  %204 = vmatpush2.msra.mxu0 0.0
  %205 = vmatprep.subr.mxu0 0.0
  %206 = vmatpush2.msra.mxu0 0.0
  %207 = vmatprep.mubr.f32.mxu0 0.0
  %208 = vmatmul.mubr.f32.gmra.mxu0 %v36
  %v209 = vpop.f32.mrf.mxu0
  %v210 = vadd.f32 0.0, %v209
  %v211 = vpop.f32.mrf.mxu0
  %212 = vmatprep.mubr.f32.mxu0 0.0
  %213 = vmatmul.mubr.f32.gmra.mxu0 %v39
  %v214 = vpop.f32.mrf.mxu0
  %v215 = vadd.f32 0.0, %v214
  %v216 = vpop.f32.mrf.mxu0
  %217 = vmatprep.mubr.f32.mxu0 0.0
  %218 = vmatmul.mubr.f32.gmra.mxu0 %v42
  %v219 = vpop.f32.mrf.mxu0
  %v220 = vadd.f32 0.0, %v219
  %v221 = vpop.f32.mrf.mxu0
  %222 = vmatprep.mubr.f32.mxu0 0.0
  %223 = vmatmul.mubr.f32.gmra.mxu0 %v45
  %v224 = vpop.f32.mrf.mxu0
  %v225 = vadd.f32 0.0, %v224
  %v226 = vpop.f32.mrf.mxu0
  %227 = vdwg.mxu0
  %v228 = vand.u32 2147483647, %v121
  %vm229 = vcmp.le.f32.partialorder %v228, 0.7853982
  %vm230 = vcmp.lt.s32.totalorder %v121, 0
  %v231 = vand.u32 %v121, 2139095040
  %v232 = vshrl.u32 %v231, 23
  %v233 = vsub.s32 %v232, 127
  %v234 = vand.u32 2147483647, %v121
  %v235 = vand.u32 %v234, 8388607
  %v236 = vor.u32 %v235, 8388608
  %v237 = vsub.s32 0, %v236
  %v238 = vadd.s32 %v233, 1
  %vm239 = vcmp.gt.s32.totalorder %v238, 0
  %v240 = vsel %vm239, %v238, 0
  %v241 = vshrl.u32 %v240, 5
  %v242 = vand.u32 %v240, 31
  %v243 = vsub.s32 32, %v242
  %v244 = vshrl.u32 683565275, %v243
  %v245 = vshll.u32 683565275, %v242
  %v246 = vshrl.u32 2475754826, %v243
  %v247 = vor.u32 %v245, %v246
  %v248 = vshll.u32 2475754826, %v242
  %v249 = vshrl.u32 2131351028, %v243
  %v250 = vor.u32 %v248, %v249
  %v251 = vshll.u32 2131351028, %v242
  %v252 = vshrl.u32 2102212464, %v243
  %v253 = vor.u32 %v251, %v252
  %v254 = vshll.u32 2102212464, %v242
  %v255 = vshrl.u32 920167782, %v243
  %v256 = vor.u32 %v254, %v255
  %v257 = vshll.u32 920167782, %v242
  %v258 = vshrl.u32 1326507024, %v243
  %v259 = vor.u32 %v257, %v258
  %vm260 = vcmp.lt.s32.totalorder %v241, 1
  %vm261 = vcmp.lt.s32.totalorder %v241, 2
  %vm262 = vcmp.lt.s32.totalorder %v241, 3
  %vm263 = vcmp.lt.s32.totalorder %v241, 4
  %v264 = vsel %vm260, %v244, %v247
  %v265 = vsel %vm263, %v253, 2102212464
  %v266 = vsel %vm262, %v250, %v265
  %v267 = vsel %vm261, %v264, %v266
  %v268 = vsel %vm260, %v247, %v250
  %v269 = vsel %vm263, %v256, 920167782
  %v270 = vsel %vm262, %v253, %v269
  %v271 = vsel %vm261, %v268, %v270
  %v272 = vsel %vm260, %v250, %v253
  %v273 = vsel %vm263, %v259, 1326507024
  %v274 = vsel %vm262, %v256, %v273
  %v275 = vsel %vm261, %v272, %v274
  %v276 = vshll.u32 %v236, 8
  %v277 = vmul.u32.u64.compose %v276, %v275
  %v278 = vextract.low.u32 %v277
  %v279 = vextract.high.u32 %v277
  %v280 = vmul.u32.u64.compose %v276, %v271
  %v281 = vextract.low.u32 %v280
  %v282 = vextract.high.u32 %v280
  %v283 = vmul.u32 %v276, %v267
  %v284 = vadd.s32 %v279, %v281
  %vm285 = vc.u32 %v279, %v281
  %v286 = vadd.s32 %v282, 1
  %v287 = vsel %vm285, %v286, %v282
  %v288 = vadd.s32 %v283, %v287
  %v289 = vadd.s32 %v288, 536870912
  %v290 = vshrl.u32 %v289, 30
  %v291 = vshll.u32 %v290, 30
  %v292 = vsub.s32 %v288, %v291
  %vm293 = vcmp.lt.s32.totalorder %v292, 0
  %v294 = vsub.s32 0, %v292
  %v295 = vsel %vm293, %v294, %v292
  %v296 = vclz %v295
  %v297 = vsub.s32 %v296, 2
  %vm298 = vcmp.gt.s32.totalorder 0, %v297
  %v299 = vsel %vm298, 0, %v297
  %v300 = vsub.s32 32, %v299
  %v301 = vshll.u32 %v292, %v299
  %v302 = vshrl.u32 %v284, %v300
  %v303 = vor.u32 %v301, %v302
  %v304 = vsub.s32 4294967266, %v299
  %v305 = vadd.s32 %v304, 127
  %v306 = vshll.u32 %v305, 23
  %v307 = vor.u32 4788187, %v306
  %v308 = vand.u32 2147483647, %v307
  %v310 = vcvt.s32.f32 %v303
  %v311 = vmul.f32 %v310, %v308
  %v312 = vxor.u32 %v311, 2147483648
  %v313 = vsel %vm230, %v312, %v311
  %v314 = vsub.s32 4, %v290
  %v315 = vsel %vm230, %v314, %v290
  %v316 = vsel %vm229, %v121, %v313
  %v317 = vsel %vm229, 0, %v315
  %v318 = vcosq.f32.pop %v316
  %v319 = vsinq.f32.pop %v316
  %vm320 = vweird.f32 %v121
  %v321 = vadd.s32 %v317, 3
  %v322 = vand.u32 %v321, 3
  %vm323 = vcmp.lt.s32.totalorder %v322, 2
  %vm324 = vcmp.eq.s32.totalorder %v322, 0
  %v325 = vxor.u32 %v319, 2147483648
  %v326 = vsel %vm324, %v318, %v325
  %vm327 = vcmp.eq.s32.totalorder %v322, 2
  %v328 = vxor.u32 %v318, 2147483648
  %v329 = vsel %vm327, %v328, %v319
  %v330 = vsel %vm323, %v326, %v329
  %v331 = vsel %vm320, nan, %v330
  %v332 = vand.u32 2147483647, %v123
  %vm333 = vcmp.le.f32.partialorder %v332, 0.7853982
  %vm334 = vcmp.lt.s32.totalorder %v123, 0
  %v335 = vand.u32 %v123, 2139095040
  %v336 = vshrl.u32 %v335, 23
  %v337 = vsub.s32 %v336, 127
  %v338 = vand.u32 2147483647, %v123
  %v339 = vand.u32 %v338, 8388607
  %v340 = vor.u32 %v339, 8388608
  %v341 = vsub.s32 0, %v340
  %v342 = vadd.s32 %v337, 1
  %vm343 = vcmp.gt.s32.totalorder %v342, 0
  %v344 = vsel %vm343, %v342, 0
  %v345 = vshrl.u32 %v344, 5
  %v346 = vand.u32 %v344, 31
  %v347 = vsub.s32 32, %v346
  %v348 = vshrl.u32 683565275, %v347
  %v349 = vshll.u32 683565275, %v346
  %v350 = vshrl.u32 2475754826, %v347
  %v351 = vor.u32 %v349, %v350
  %v352 = vshll.u32 2475754826, %v346
  %v353 = vshrl.u32 2131351028, %v347
  %v354 = vor.u32 %v352, %v353
  %v355 = vshll.u32 2131351028, %v346
  %v356 = vshrl.u32 2102212464, %v347
  %v357 = vor.u32 %v355, %v356
  %v358 = vshll.u32 2102212464, %v346
  %v359 = vshrl.u32 920167782, %v347
  %v360 = vor.u32 %v358, %v359
  %v361 = vshll.u32 920167782, %v346
  %v362 = vshrl.u32 1326507024, %v347
  %v363 = vor.u32 %v361, %v362
  %vm364 = vcmp.lt.s32.totalorder %v345, 1
  %vm365 = vcmp.lt.s32.totalorder %v345, 2
  %vm366 = vcmp.lt.s32.totalorder %v345, 3
  %vm367 = vcmp.lt.s32.totalorder %v345, 4
  %v368 = vsel %vm364, %v348, %v351
  %v369 = vsel %vm367, %v357, 2102212464
  %v370 = vsel %vm366, %v354, %v369
  %v371 = vsel %vm365, %v368, %v370
  %v372 = vsel %vm364, %v351, %v354
  %v373 = vsel %vm367, %v360, 920167782
  %v374 = vsel %vm366, %v357, %v373
  %v375 = vsel %vm365, %v372, %v374
  %v376 = vsel %vm364, %v354, %v357
  %v377 = vsel %vm367, %v363, 1326507024
  %v378 = vsel %vm366, %v360, %v377
  %v379 = vsel %vm365, %v376, %v378
  %v380 = vshll.u32 %v340, 8
  %v381 = vmul.u32.u64.compose %v380, %v379
  %v382 = vextract.low.u32 %v381
  %v383 = vextract.high.u32 %v381
  %v384 = vmul.u32.u64.compose %v380, %v375
  %v385 = vextract.low.u32 %v384
  %v386 = vextract.high.u32 %v384
  %v387 = vmul.u32 %v380, %v371
  %v388 = vadd.s32 %v383, %v385
  %vm389 = vc.u32 %v383, %v385
  %v390 = vadd.s32 %v386, 1
  %v391 = vsel %vm389, %v390, %v386
  %v392 = vadd.s32 %v387, %v391
  %v393 = vadd.s32 %v392, 536870912
  %v394 = vshrl.u32 %v393, 30
  %v395 = vshll.u32 %v394, 30
  %v396 = vsub.s32 %v392, %v395
  %vm397 = vcmp.lt.s32.totalorder %v396, 0
  %v398 = vsub.s32 0, %v396
  %v399 = vsel %vm397, %v398, %v396
  %v400 = vclz %v399
  %v401 = vsub.s32 %v400, 2
  %vm402 = vcmp.gt.s32.totalorder 0, %v401
  %v403 = vsel %vm402, 0, %v401
  %v404 = vsub.s32 32, %v403
  %v405 = vshll.u32 %v396, %v403
  %v406 = vshrl.u32 %v388, %v404
  %v407 = vor.u32 %v405, %v406
  %v408 = vsub.s32 4294967266, %v403
  %v409 = vadd.s32 %v408, 127
  %v410 = vshll.u32 %v409, 23
  %v411 = vor.u32 4788187, %v410
  %v412 = vand.u32 2147483647, %v411
  %v414 = vcvt.s32.f32 %v407
  %v415 = vmul.f32 %v414, %v412
  %v416 = vxor.u32 %v415, 2147483648
  %v417 = vsel %vm334, %v416, %v415
  %v418 = vsub.s32 4, %v394
  %v419 = vsel %vm334, %v418, %v394
  %v420 = vsel %vm333, %v123, %v417
  %v421 = vsel %vm333, 0, %v419
  %v422 = vcosq.f32.pop %v420
  %v423 = vsinq.f32.pop %v420
  %vm424 = vweird.f32 %v123
  %v425 = vadd.s32 %v421, 3
  %v426 = vand.u32 %v425, 3
  %vm427 = vcmp.lt.s32.totalorder %v426, 2
  %vm428 = vcmp.eq.s32.totalorder %v426, 0
  %v429 = vxor.u32 %v423, 2147483648
  %v430 = vsel %vm428, %v422, %v429
  %vm431 = vcmp.eq.s32.totalorder %v426, 2
  %v432 = vxor.u32 %v422, 2147483648
  %v433 = vsel %vm431, %v432, %v423
  %v434 = vsel %vm427, %v430, %v433
  %v435 = vsel %vm424, nan, %v434
  %v436 = vand.u32 2147483647, %v210
  %vm437 = vcmp.le.f32.partialorder %v436, 0.7853982
  %vm438 = vcmp.lt.s32.totalorder %v210, 0
  %v439 = vand.u32 %v210, 2139095040
  %v440 = vshrl.u32 %v439, 23
  %v441 = vsub.s32 %v440, 127
  %v442 = vand.u32 2147483647, %v210
  %v443 = vand.u32 %v442, 8388607
  %v444 = vor.u32 %v443, 8388608
  %v445 = vsub.s32 0, %v444
  %v446 = vadd.s32 %v441, 1
  %vm447 = vcmp.gt.s32.totalorder %v446, 0
  %v448 = vsel %vm447, %v446, 0
  %v449 = vshrl.u32 %v448, 5
  %v450 = vand.u32 %v448, 31
  %v451 = vsub.s32 32, %v450
  %v452 = vshrl.u32 683565275, %v451
  %v453 = vshll.u32 683565275, %v450
  %v454 = vshrl.u32 2475754826, %v451
  %v455 = vor.u32 %v453, %v454
  %v456 = vshll.u32 2475754826, %v450
  %v457 = vshrl.u32 2131351028, %v451
  %v458 = vor.u32 %v456, %v457
  %v459 = vshll.u32 2131351028, %v450
  %v460 = vshrl.u32 2102212464, %v451
  %v461 = vor.u32 %v459, %v460
  %v462 = vshll.u32 2102212464, %v450
  %v463 = vshrl.u32 920167782, %v451
  %v464 = vor.u32 %v462, %v463
  %v465 = vshll.u32 920167782, %v450
  %v466 = vshrl.u32 1326507024, %v451
  %v467 = vor.u32 %v465, %v466
  %vm468 = vcmp.lt.s32.totalorder %v449, 1
  %vm469 = vcmp.lt.s32.totalorder %v449, 2
  %vm470 = vcmp.lt.s32.totalorder %v449, 3
  %vm471 = vcmp.lt.s32.totalorder %v449, 4
  %v472 = vsel %vm468, %v452, %v455
  %v473 = vsel %vm471, %v461, 2102212464
  %v474 = vsel %vm470, %v458, %v473
  %v475 = vsel %vm469, %v472, %v474
  %v476 = vsel %vm468, %v455, %v458
  %v477 = vsel %vm471, %v464, 920167782
  %v478 = vsel %vm470, %v461, %v477
  %v479 = vsel %vm469, %v476, %v478
  %v480 = vsel %vm468, %v458, %v461
  %v481 = vsel %vm471, %v467, 1326507024
  %v482 = vsel %vm470, %v464, %v481
  %v483 = vsel %vm469, %v480, %v482
  %v484 = vshll.u32 %v444, 8
  %v485 = vmul.u32.u64.compose %v484, %v483
  %v486 = vextract.low.u32 %v485
  %v487 = vextract.high.u32 %v485
  %v488 = vmul.u32.u64.compose %v484, %v479
  %v489 = vextract.low.u32 %v488
  %v490 = vextract.high.u32 %v488
  %v491 = vmul.u32 %v484, %v475
  %v492 = vadd.s32 %v487, %v489
  %vm493 = vc.u32 %v487, %v489
  %v494 = vadd.s32 %v490, 1
  %v495 = vsel %vm493, %v494, %v490
  %v496 = vadd.s32 %v491, %v495
  %v497 = vadd.s32 %v496, 536870912
  %v498 = vshrl.u32 %v497, 30
  %v499 = vshll.u32 %v498, 30
  %v500 = vsub.s32 %v496, %v499
  %vm501 = vcmp.lt.s32.totalorder %v500, 0
  %v502 = vsub.s32 0, %v500
  %v503 = vsel %vm501, %v502, %v500
  %v504 = vclz %v503
  %v505 = vsub.s32 %v504, 2
  %vm506 = vcmp.gt.s32.totalorder 0, %v505
  %v507 = vsel %vm506, 0, %v505
  %v508 = vsub.s32 32, %v507
  %v509 = vshll.u32 %v500, %v507
  %v510 = vshrl.u32 %v492, %v508
  %v511 = vor.u32 %v509, %v510
  %v512 = vsub.s32 4294967266, %v507
  %v513 = vadd.s32 %v512, 127
  %v514 = vshll.u32 %v513, 23
  %v515 = vor.u32 4788187, %v514
  %v516 = vand.u32 2147483647, %v515
  %v518 = vcvt.s32.f32 %v511
  %v519 = vmul.f32 %v518, %v516
  %v520 = vxor.u32 %v519, 2147483648
  %v521 = vsel %vm438, %v520, %v519
  %v522 = vsub.s32 4, %v498
  %v523 = vsel %vm438, %v522, %v498
  %v524 = vsel %vm437, %v210, %v521
  %v525 = vsel %vm437, 0, %v523
  %v526 = vcosq.f32.pop %v524
  %v527 = vsinq.f32.pop %v524
  %vm528 = vweird.f32 %v210
  %v529 = vadd.s32 %v525, 3
  %v530 = vand.u32 %v529, 3
  %vm531 = vcmp.lt.s32.totalorder %v530, 2
  %vm532 = vcmp.eq.s32.totalorder %v530, 0
  %v533 = vxor.u32 %v527, 2147483648
  %v534 = vsel %vm532, %v526, %v533
  %vm535 = vcmp.eq.s32.totalorder %v530, 2
  %v536 = vxor.u32 %v526, 2147483648
  %v537 = vsel %vm535, %v536, %v527
  %v538 = vsel %vm531, %v534, %v537
  %v539 = vsel %vm528, nan, %v538
  %v540 = vand.u32 2147483647, %v127
  %vm541 = vcmp.le.f32.partialorder %v540, 0.7853982
  %vm542 = vcmp.lt.s32.totalorder %v127, 0
  %v543 = vand.u32 %v127, 2139095040
  %v544 = vshrl.u32 %v543, 23
  %v545 = vsub.s32 %v544, 127
  %v546 = vand.u32 2147483647, %v127
  %v547 = vand.u32 %v546, 8388607
  %v548 = vor.u32 %v547, 8388608
  %v549 = vsub.s32 0, %v548
  %v550 = vadd.s32 %v545, 1
  %vm551 = vcmp.gt.s32.totalorder %v550, 0
  %v552 = vsel %vm551, %v550, 0
  %v553 = vshrl.u32 %v552, 5
  %v554 = vand.u32 %v552, 31
  %v555 = vsub.s32 32, %v554
  %v556 = vshrl.u32 683565275, %v555
  %v557 = vshll.u32 683565275, %v554
  %v558 = vshrl.u32 2475754826, %v555
  %v559 = vor.u32 %v557, %v558
  %v560 = vshll.u32 2475754826, %v554
  %v561 = vshrl.u32 2131351028, %v555
  %v562 = vor.u32 %v560, %v561
  %v563 = vshll.u32 2131351028, %v554
  %v564 = vshrl.u32 2102212464, %v555
  %v565 = vor.u32 %v563, %v564
  %v566 = vshll.u32 2102212464, %v554
  %v567 = vshrl.u32 920167782, %v555
  %v568 = vor.u32 %v566, %v567
  %v569 = vshll.u32 920167782, %v554
  %v570 = vshrl.u32 1326507024, %v555
  %v571 = vor.u32 %v569, %v570
  %vm572 = vcmp.lt.s32.totalorder %v553, 1
  %vm573 = vcmp.lt.s32.totalorder %v553, 2
  %vm574 = vcmp.lt.s32.totalorder %v553, 3
  %vm575 = vcmp.lt.s32.totalorder %v553, 4
  %v576 = vsel %vm572, %v556, %v559
  %v577 = vsel %vm575, %v565, 2102212464
  %v578 = vsel %vm574, %v562, %v577
  %v579 = vsel %vm573, %v576, %v578
  %v580 = vsel %vm572, %v559, %v562
  %v581 = vsel %vm575, %v568, 920167782
  %v582 = vsel %vm574, %v565, %v581
  %v583 = vsel %vm573, %v580, %v582
  %v584 = vsel %vm572, %v562, %v565
  %v585 = vsel %vm575, %v571, 1326507024
  %v586 = vsel %vm574, %v568, %v585
  %v587 = vsel %vm573, %v584, %v586
  %v588 = vshll.u32 %v548, 8
  %v589 = vmul.u32.u64.compose %v588, %v587
  %v590 = vextract.low.u32 %v589
  %v591 = vextract.high.u32 %v589
  %v592 = vmul.u32.u64.compose %v588, %v583
  %v593 = vextract.low.u32 %v592
  %v594 = vextract.high.u32 %v592
  %v595 = vmul.u32 %v588, %v579
  %v596 = vadd.s32 %v591, %v593
  %vm597 = vc.u32 %v591, %v593
  %v598 = vadd.s32 %v594, 1
  %v599 = vsel %vm597, %v598, %v594
  %v600 = vadd.s32 %v595, %v599
  %v601 = vadd.s32 %v600, 536870912
  %v602 = vshrl.u32 %v601, 30
  %v603 = vshll.u32 %v602, 30
  %v604 = vsub.s32 %v600, %v603
  %vm605 = vcmp.lt.s32.totalorder %v604, 0
  %v606 = vsub.s32 0, %v604
  %v607 = vsel %vm605, %v606, %v604
  %v608 = vclz %v607
  %v609 = vsub.s32 %v608, 2
  %vm610 = vcmp.gt.s32.totalorder 0, %v609
  %v611 = vsel %vm610, 0, %v609
  %v612 = vsub.s32 32, %v611
  %v613 = vshll.u32 %v604, %v611
  %v614 = vshrl.u32 %v596, %v612
  %v615 = vor.u32 %v613, %v614
  %v616 = vsub.s32 4294967266, %v611
  %v617 = vadd.s32 %v616, 127
  %v618 = vshll.u32 %v617, 23
  %v619 = vor.u32 4788187, %v618
  %v620 = vand.u32 2147483647, %v619
  %v622 = vcvt.s32.f32 %v615
  %v623 = vmul.f32 %v622, %v620
  %v624 = vxor.u32 %v623, 2147483648
  %v625 = vsel %vm542, %v624, %v623
  %v626 = vsub.s32 4, %v602
  %v627 = vsel %vm542, %v626, %v602
  %v628 = vsel %vm541, %v127, %v625
  %v629 = vsel %vm541, 0, %v627
  %v630 = vcosq.f32.pop %v628
  %v631 = vsinq.f32.pop %v628
  %vm632 = vweird.f32 %v127
  %v633 = vadd.s32 %v629, 3
  %v634 = vand.u32 %v633, 3
  %vm635 = vcmp.lt.s32.totalorder %v634, 2
  %vm636 = vcmp.eq.s32.totalorder %v634, 0
  %v637 = vxor.u32 %v631, 2147483648
  %v638 = vsel %vm636, %v630, %v637
  %vm639 = vcmp.eq.s32.totalorder %v634, 2
  %v640 = vxor.u32 %v630, 2147483648
  %v641 = vsel %vm639, %v640, %v631
  %v642 = vsel %vm635, %v638, %v641
  %v643 = vsel %vm632, nan, %v642
  %v644 = vand.u32 2147483647, %v129
  %vm645 = vcmp.le.f32.partialorder %v644, 0.7853982
  %vm646 = vcmp.lt.s32.totalorder %v129, 0
  %v647 = vand.u32 %v129, 2139095040
  %v648 = vshrl.u32 %v647, 23
  %v649 = vsub.s32 %v648, 127
  %v650 = vand.u32 2147483647, %v129
  %v651 = vand.u32 %v650, 8388607
  %v652 = vor.u32 %v651, 8388608
  %v653 = vsub.s32 0, %v652
  %v654 = vadd.s32 %v649, 1
  %vm655 = vcmp.gt.s32.totalorder %v654, 0
  %v656 = vsel %vm655, %v654, 0
  %v657 = vshrl.u32 %v656, 5
  %v658 = vand.u32 %v656, 31
  %v659 = vsub.s32 32, %v658
  %v660 = vshrl.u32 683565275, %v659
  %v661 = vshll.u32 683565275, %v658
  %v662 = vshrl.u32 2475754826, %v659
  %v663 = vor.u32 %v661, %v662
  %v664 = vshll.u32 2475754826, %v658
  %v665 = vshrl.u32 2131351028, %v659
  %v666 = vor.u32 %v664, %v665
  %v667 = vshll.u32 2131351028, %v658
  %v668 = vshrl.u32 2102212464, %v659
  %v669 = vor.u32 %v667, %v668
  %v670 = vshll.u32 2102212464, %v658
  %v671 = vshrl.u32 920167782, %v659
  %v672 = vor.u32 %v670, %v671
  %v673 = vshll.u32 920167782, %v658
  %v674 = vshrl.u32 1326507024, %v659
  %v675 = vor.u32 %v673, %v674
  %vm676 = vcmp.lt.s32.totalorder %v657, 1
  %vm677 = vcmp.lt.s32.totalorder %v657, 2
  %vm678 = vcmp.lt.s32.totalorder %v657, 3
  %vm679 = vcmp.lt.s32.totalorder %v657, 4
  %v680 = vsel %vm676, %v660, %v663
  %v681 = vsel %vm679, %v669, 2102212464
  %v682 = vsel %vm678, %v666, %v681
  %v683 = vsel %vm677, %v680, %v682
  %v684 = vsel %vm676, %v663, %v666
  %v685 = vsel %vm679, %v672, 920167782
  %v686 = vsel %vm678, %v669, %v685
  %v687 = vsel %vm677, %v684, %v686
  %v688 = vsel %vm676, %v666, %v669
  %v689 = vsel %vm679, %v675, 1326507024
  %v690 = vsel %vm678, %v672, %v689
  %v691 = vsel %vm677, %v688, %v690
  %v692 = vshll.u32 %v652, 8
  %v693 = vmul.u32.u64.compose %v692, %v691
  %v694 = vextract.low.u32 %v693
  %v695 = vextract.high.u32 %v693
  %v696 = vmul.u32.u64.compose %v692, %v687
  %v697 = vextract.low.u32 %v696
  %v698 = vextract.high.u32 %v696
  %v699 = vmul.u32 %v692, %v683
  %v700 = vadd.s32 %v695, %v697
  %vm701 = vc.u32 %v695, %v697
  %v702 = vadd.s32 %v698, 1
  %v703 = vsel %vm701, %v702, %v698
  %v704 = vadd.s32 %v699, %v703
  %v705 = vadd.s32 %v704, 536870912
  %v706 = vshrl.u32 %v705, 30
  %v707 = vshll.u32 %v706, 30
  %v708 = vsub.s32 %v704, %v707
  %vm709 = vcmp.lt.s32.totalorder %v708, 0
  %v710 = vsub.s32 0, %v708
  %v711 = vsel %vm709, %v710, %v708
  %v712 = vclz %v711
  %v713 = vsub.s32 %v712, 2
  %vm714 = vcmp.gt.s32.totalorder 0, %v713
  %v715 = vsel %vm714, 0, %v713
  %v716 = vsub.s32 32, %v715
  %v717 = vshll.u32 %v708, %v715
  %v718 = vshrl.u32 %v700, %v716
  %v719 = vor.u32 %v717, %v718
  %v720 = vsub.s32 4294967266, %v715
  %v721 = vadd.s32 %v720, 127
  %v722 = vshll.u32 %v721, 23
  %v723 = vor.u32 4788187, %v722
  %v724 = vand.u32 2147483647, %v723
  %v726 = vcvt.s32.f32 %v719
  %v727 = vmul.f32 %v726, %v724
  %v728 = vxor.u32 %v727, 2147483648
  %v729 = vsel %vm646, %v728, %v727
  %v730 = vsub.s32 4, %v706
  %v731 = vsel %vm646, %v730, %v706
  %v732 = vsel %vm645, %v129, %v729
  %v733 = vsel %vm645, 0, %v731
  %v734 = vcosq.f32.pop %v732
  %v735 = vsinq.f32.pop %v732
  %vm736 = vweird.f32 %v129
  %v737 = vadd.s32 %v733, 3
  %v738 = vand.u32 %v737, 3
  %vm739 = vcmp.lt.s32.totalorder %v738, 2
  %vm740 = vcmp.eq.s32.totalorder %v738, 0
  %v741 = vxor.u32 %v735, 2147483648
  %v742 = vsel %vm740, %v734, %v741
  %vm743 = vcmp.eq.s32.totalorder %v738, 2
  %v744 = vxor.u32 %v734, 2147483648
  %v745 = vsel %vm743, %v744, %v735
  %v746 = vsel %vm739, %v742, %v745
  %v747 = vsel %vm736, nan, %v746
  %v748 = vand.u32 2147483647, %v215
  %vm749 = vcmp.le.f32.partialorder %v748, 0.7853982
  %vm750 = vcmp.lt.s32.totalorder %v215, 0
  %v751 = vand.u32 %v215, 2139095040
  %v752 = vshrl.u32 %v751, 23
  %v753 = vsub.s32 %v752, 127
  %v754 = vand.u32 2147483647, %v215
  %v755 = vand.u32 %v754, 8388607
  %v756 = vor.u32 %v755, 8388608
  %v757 = vsub.s32 0, %v756
  %v758 = vadd.s32 %v753, 1
  %vm759 = vcmp.gt.s32.totalorder %v758, 0
  %v760 = vsel %vm759, %v758, 0
  %v761 = vshrl.u32 %v760, 5
  %v762 = vand.u32 %v760, 31
  %v763 = vsub.s32 32, %v762
  %v764 = vshrl.u32 683565275, %v763
  %v765 = vshll.u32 683565275, %v762
  %v766 = vshrl.u32 2475754826, %v763
  %v767 = vor.u32 %v765, %v766
  %v768 = vshll.u32 2475754826, %v762
  %v769 = vshrl.u32 2131351028, %v763
  %v770 = vor.u32 %v768, %v769
  %v771 = vshll.u32 2131351028, %v762
  %v772 = vshrl.u32 2102212464, %v763
  %v773 = vor.u32 %v771, %v772
  %v774 = vshll.u32 2102212464, %v762
  %v775 = vshrl.u32 920167782, %v763
  %v776 = vor.u32 %v774, %v775
  %v777 = vshll.u32 920167782, %v762
  %v778 = vshrl.u32 1326507024, %v763
  %v779 = vor.u32 %v777, %v778
  %vm780 = vcmp.lt.s32.totalorder %v761, 1
  %vm781 = vcmp.lt.s32.totalorder %v761, 2
  %vm782 = vcmp.lt.s32.totalorder %v761, 3
  %vm783 = vcmp.lt.s32.totalorder %v761, 4
  %v784 = vsel %vm780, %v764, %v767
  %v785 = vsel %vm783, %v773, 2102212464
  %v786 = vsel %vm782, %v770, %v785
  %v787 = vsel %vm781, %v784, %v786
  %v788 = vsel %vm780, %v767, %v770
  %v789 = vsel %vm783, %v776, 920167782
  %v790 = vsel %vm782, %v773, %v789
  %v791 = vsel %vm781, %v788, %v790
  %v792 = vsel %vm780, %v770, %v773
  %v793 = vsel %vm783, %v779, 1326507024
  %v794 = vsel %vm782, %v776, %v793
  %v795 = vsel %vm781, %v792, %v794
  %v796 = vshll.u32 %v756, 8
  %v797 = vmul.u32.u64.compose %v796, %v795
  %v798 = vextract.low.u32 %v797
  %v799 = vextract.high.u32 %v797
  %v800 = vmul.u32.u64.compose %v796, %v791
  %v801 = vextract.low.u32 %v800
  %v802 = vextract.high.u32 %v800
  %v803 = vmul.u32 %v796, %v787
  %v804 = vadd.s32 %v799, %v801
  %vm805 = vc.u32 %v799, %v801
  %v806 = vadd.s32 %v802, 1
  %v807 = vsel %vm805, %v806, %v802
  %v808 = vadd.s32 %v803, %v807
  %v809 = vadd.s32 %v808, 536870912
  %v810 = vshrl.u32 %v809, 30
  %v811 = vshll.u32 %v810, 30
  %v812 = vsub.s32 %v808, %v811
  %vm813 = vcmp.lt.s32.totalorder %v812, 0
  %v814 = vsub.s32 0, %v812
  %v815 = vsel %vm813, %v814, %v812
  %v816 = vclz %v815
  %v817 = vsub.s32 %v816, 2
  %vm818 = vcmp.gt.s32.totalorder 0, %v817
  %v819 = vsel %vm818, 0, %v817
  %v820 = vsub.s32 32, %v819
  %v821 = vshll.u32 %v812, %v819
  %v822 = vshrl.u32 %v804, %v820
  %v823 = vor.u32 %v821, %v822
  %v824 = vsub.s32 4294967266, %v819
  %v825 = vadd.s32 %v824, 127
  %v826 = vshll.u32 %v825, 23
  %v827 = vor.u32 4788187, %v826
  %v828 = vand.u32 2147483647, %v827
  %v830 = vcvt.s32.f32 %v823
  %v831 = vmul.f32 %v830, %v828
  %v832 = vxor.u32 %v831, 2147483648
  %v833 = vsel %vm750, %v832, %v831
  %v834 = vsub.s32 4, %v810
  %v835 = vsel %vm750, %v834, %v810
  %v836 = vsel %vm749, %v215, %v833
  %v837 = vsel %vm749, 0, %v835
  %v838 = vcosq.f32.pop %v836
  %v839 = vsinq.f32.pop %v836
  %vm840 = vweird.f32 %v215
  %v841 = vadd.s32 %v837, 3
  %v842 = vand.u32 %v841, 3
  %vm843 = vcmp.lt.s32.totalorder %v842, 2
  %vm844 = vcmp.eq.s32.totalorder %v842, 0
  %v845 = vxor.u32 %v839, 2147483648
  %v846 = vsel %vm844, %v838, %v845
  %vm847 = vcmp.eq.s32.totalorder %v842, 2
  %v848 = vxor.u32 %v838, 2147483648
  %v849 = vsel %vm847, %v848, %v839
  %v850 = vsel %vm843, %v846, %v849
  %v851 = vsel %vm840, nan, %v850
  %v852 = vand.u32 2147483647, %v133
  %vm853 = vcmp.le.f32.partialorder %v852, 0.7853982
  %vm854 = vcmp.lt.s32.totalorder %v133, 0
  %v855 = vand.u32 %v133, 2139095040
  %v856 = vshrl.u32 %v855, 23
  %v857 = vsub.s32 %v856, 127
  %v858 = vand.u32 2147483647, %v133
  %v859 = vand.u32 %v858, 8388607
  %v860 = vor.u32 %v859, 8388608
  %v861 = vsub.s32 0, %v860
  %v862 = vadd.s32 %v857, 1
  %vm863 = vcmp.gt.s32.totalorder %v862, 0
  %v864 = vsel %vm863, %v862, 0
  %v865 = vshrl.u32 %v864, 5
  %v866 = vand.u32 %v864, 31
  %v867 = vsub.s32 32, %v866
  %v868 = vshrl.u32 683565275, %v867
  %v869 = vshll.u32 683565275, %v866
  %v870 = vshrl.u32 2475754826, %v867
  %v871 = vor.u32 %v869, %v870
  %v872 = vshll.u32 2475754826, %v866
  %v873 = vshrl.u32 2131351028, %v867
  %v874 = vor.u32 %v872, %v873
  %v875 = vshll.u32 2131351028, %v866
  %v876 = vshrl.u32 2102212464, %v867
  %v877 = vor.u32 %v875, %v876
  %v878 = vshll.u32 2102212464, %v866
  %v879 = vshrl.u32 920167782, %v867
  %v880 = vor.u32 %v878, %v879
  %v881 = vshll.u32 920167782, %v866
  %v882 = vshrl.u32 1326507024, %v867
  %v883 = vor.u32 %v881, %v882
  %vm884 = vcmp.lt.s32.totalorder %v865, 1
  %vm885 = vcmp.lt.s32.totalorder %v865, 2
  %vm886 = vcmp.lt.s32.totalorder %v865, 3
  %vm887 = vcmp.lt.s32.totalorder %v865, 4
  %v888 = vsel %vm884, %v868, %v871
  %v889 = vsel %vm887, %v877, 2102212464
  %v890 = vsel %vm886, %v874, %v889
  %v891 = vsel %vm885, %v888, %v890
  %v892 = vsel %vm884, %v871, %v874
  %v893 = vsel %vm887, %v880, 920167782
  %v894 = vsel %vm886, %v877, %v893
  %v895 = vsel %vm885, %v892, %v894
  %v896 = vsel %vm884, %v874, %v877
  %v897 = vsel %vm887, %v883, 1326507024
  %v898 = vsel %vm886, %v880, %v897
  %v899 = vsel %vm885, %v896, %v898
  %v900 = vshll.u32 %v860, 8
  %v901 = vmul.u32.u64.compose %v900, %v899
  %v902 = vextract.low.u32 %v901
  %v903 = vextract.high.u32 %v901
  %v904 = vmul.u32.u64.compose %v900, %v895
  %v905 = vextract.low.u32 %v904
  %v906 = vextract.high.u32 %v904
  %v907 = vmul.u32 %v900, %v891
  %v908 = vadd.s32 %v903, %v905
  %vm909 = vc.u32 %v903, %v905
  %v910 = vadd.s32 %v906, 1
  %v911 = vsel %vm909, %v910, %v906
  %v912 = vadd.s32 %v907, %v911
  %v913 = vadd.s32 %v912, 536870912
  %v914 = vshrl.u32 %v913, 30
  %v915 = vshll.u32 %v914, 30
  %v916 = vsub.s32 %v912, %v915
  %vm917 = vcmp.lt.s32.totalorder %v916, 0
  %v918 = vsub.s32 0, %v916
  %v919 = vsel %vm917, %v918, %v916
  %v920 = vclz %v919
  %v921 = vsub.s32 %v920, 2
  %vm922 = vcmp.gt.s32.totalorder 0, %v921
  %v923 = vsel %vm922, 0, %v921
  %v924 = vsub.s32 32, %v923
  %v925 = vshll.u32 %v916, %v923
  %v926 = vshrl.u32 %v908, %v924
  %v927 = vor.u32 %v925, %v926
  %v928 = vsub.s32 4294967266, %v923
  %v929 = vadd.s32 %v928, 127
  %v930 = vshll.u32 %v929, 23
  %v931 = vor.u32 4788187, %v930
  %v932 = vand.u32 2147483647, %v931
  %v934 = vcvt.s32.f32 %v927
  %v935 = vmul.f32 %v934, %v932
  %v936 = vxor.u32 %v935, 2147483648
  %v937 = vsel %vm854, %v936, %v935
  %v938 = vsub.s32 4, %v914
  %v939 = vsel %vm854, %v938, %v914
  %v940 = vsel %vm853, %v133, %v937
  %v941 = vsel %vm853, 0, %v939
  %v942 = vcosq.f32.pop %v940
  %v943 = vsinq.f32.pop %v940
  %vm944 = vweird.f32 %v133
  %v945 = vadd.s32 %v941, 3
  %v946 = vand.u32 %v945, 3
  %vm947 = vcmp.lt.s32.totalorder %v946, 2
  %vm948 = vcmp.eq.s32.totalorder %v946, 0
  %v949 = vxor.u32 %v943, 2147483648
  %v950 = vsel %vm948, %v942, %v949
  %vm951 = vcmp.eq.s32.totalorder %v946, 2
  %v952 = vxor.u32 %v942, 2147483648
  %v953 = vsel %vm951, %v952, %v943
  %v954 = vsel %vm947, %v950, %v953
  %v955 = vsel %vm944, nan, %v954
  %v956 = vand.u32 2147483647, %v135
  %vm957 = vcmp.le.f32.partialorder %v956, 0.7853982
  %vm958 = vcmp.lt.s32.totalorder %v135, 0
  %v959 = vand.u32 %v135, 2139095040
  %v960 = vshrl.u32 %v959, 23
  %v961 = vsub.s32 %v960, 127
  %v962 = vand.u32 2147483647, %v135
  %v963 = vand.u32 %v962, 8388607
  %v964 = vor.u32 %v963, 8388608
  %v965 = vsub.s32 0, %v964
  %v966 = vadd.s32 %v961, 1
  %vm967 = vcmp.gt.s32.totalorder %v966, 0
  %v968 = vsel %vm967, %v966, 0
  %v969 = vshrl.u32 %v968, 5
  %v970 = vand.u32 %v968, 31
  %v971 = vsub.s32 32, %v970
  %v972 = vshrl.u32 683565275, %v971
  %v973 = vshll.u32 683565275, %v970
  %v974 = vshrl.u32 2475754826, %v971
  %v975 = vor.u32 %v973, %v974
  %v976 = vshll.u32 2475754826, %v970
  %v977 = vshrl.u32 2131351028, %v971
  %v978 = vor.u32 %v976, %v977
  %v979 = vshll.u32 2131351028, %v970
  %v980 = vshrl.u32 2102212464, %v971
  %v981 = vor.u32 %v979, %v980
  %v982 = vshll.u32 2102212464, %v970
  %v983 = vshrl.u32 920167782, %v971
  %v984 = vor.u32 %v982, %v983
  %v985 = vshll.u32 920167782, %v970
  %v986 = vshrl.u32 1326507024, %v971
  %v987 = vor.u32 %v985, %v986
  %vm988 = vcmp.lt.s32.totalorder %v969, 1
  %vm989 = vcmp.lt.s32.totalorder %v969, 2
  %vm990 = vcmp.lt.s32.totalorder %v969, 3
  %vm991 = vcmp.lt.s32.totalorder %v969, 4
  %v992 = vsel %vm988, %v972, %v975
  %v993 = vsel %vm991, %v981, 2102212464
  %v994 = vsel %vm990, %v978, %v993
  %v995 = vsel %vm989, %v992, %v994
  %v996 = vsel %vm988, %v975, %v978
  %v997 = vsel %vm991, %v984, 920167782
  %v998 = vsel %vm990, %v981, %v997
  %v999 = vsel %vm989, %v996, %v998
  %v1000 = vsel %vm988, %v978, %v981
  %v1001 = vsel %vm991, %v987, 1326507024
  %v1002 = vsel %vm990, %v984, %v1001
  %v1003 = vsel %vm989, %v1000, %v1002
  %v1004 = vshll.u32 %v964, 8
  %v1005 = vmul.u32.u64.compose %v1004, %v1003
  %v1006 = vextract.low.u32 %v1005
  %v1007 = vextract.high.u32 %v1005
  %v1008 = vmul.u32.u64.compose %v1004, %v999
  %v1009 = vextract.low.u32 %v1008
  %v1010 = vextract.high.u32 %v1008
  %v1011 = vmul.u32 %v1004, %v995
  %v1012 = vadd.s32 %v1007, %v1009
  %vm1013 = vc.u32 %v1007, %v1009
  %v1014 = vadd.s32 %v1010, 1
  %v1015 = vsel %vm1013, %v1014, %v1010
  %v1016 = vadd.s32 %v1011, %v1015
  %v1017 = vadd.s32 %v1016, 536870912
  %v1018 = vshrl.u32 %v1017, 30
  %v1019 = vshll.u32 %v1018, 30
  %v1020 = vsub.s32 %v1016, %v1019
  %vm1021 = vcmp.lt.s32.totalorder %v1020, 0
  %v1022 = vsub.s32 0, %v1020
  %v1023 = vsel %vm1021, %v1022, %v1020
  %v1024 = vclz %v1023
  %v1025 = vsub.s32 %v1024, 2
  %vm1026 = vcmp.gt.s32.totalorder 0, %v1025
  %v1027 = vsel %vm1026, 0, %v1025
  %v1028 = vsub.s32 32, %v1027
  %v1029 = vshll.u32 %v1020, %v1027
  %v1030 = vshrl.u32 %v1012, %v1028
  %v1031 = vor.u32 %v1029, %v1030
  %v1032 = vsub.s32 4294967266, %v1027
  %v1033 = vadd.s32 %v1032, 127
  %v1034 = vshll.u32 %v1033, 23
  %v1035 = vor.u32 4788187, %v1034
  %v1036 = vand.u32 2147483647, %v1035
  %v1038 = vcvt.s32.f32 %v1031
  %v1039 = vmul.f32 %v1038, %v1036
  %v1040 = vxor.u32 %v1039, 2147483648
  %v1041 = vsel %vm958, %v1040, %v1039
  %v1042 = vsub.s32 4, %v1018
  %v1043 = vsel %vm958, %v1042, %v1018
  %v1044 = vsel %vm957, %v135, %v1041
  %v1045 = vsel %vm957, 0, %v1043
  %v1046 = vcosq.f32.pop %v1044
  %v1047 = vsinq.f32.pop %v1044
  %vm1048 = vweird.f32 %v135
  %v1049 = vadd.s32 %v1045, 3
  %v1050 = vand.u32 %v1049, 3
  %vm1051 = vcmp.lt.s32.totalorder %v1050, 2
  %vm1052 = vcmp.eq.s32.totalorder %v1050, 0
  %v1053 = vxor.u32 %v1047, 2147483648
  %v1054 = vsel %vm1052, %v1046, %v1053
  %vm1055 = vcmp.eq.s32.totalorder %v1050, 2
  %v1056 = vxor.u32 %v1046, 2147483648
  %v1057 = vsel %vm1055, %v1056, %v1047
  %v1058 = vsel %vm1051, %v1054, %v1057
  %v1059 = vsel %vm1048, nan, %v1058
  %v1060 = vand.u32 2147483647, %v220
  %vm1061 = vcmp.le.f32.partialorder %v1060, 0.7853982
  %vm1062 = vcmp.lt.s32.totalorder %v220, 0
  %v1063 = vand.u32 %v220, 2139095040
  %v1064 = vshrl.u32 %v1063, 23
  %v1065 = vsub.s32 %v1064, 127
  %v1066 = vand.u32 2147483647, %v220
  %v1067 = vand.u32 %v1066, 8388607
  %v1068 = vor.u32 %v1067, 8388608
  %v1069 = vsub.s32 0, %v1068
  %v1070 = vadd.s32 %v1065, 1
  %vm1071 = vcmp.gt.s32.totalorder %v1070, 0
  %v1072 = vsel %vm1071, %v1070, 0
  %v1073 = vshrl.u32 %v1072, 5
  %v1074 = vand.u32 %v1072, 31
  %v1075 = vsub.s32 32, %v1074
  %v1076 = vshrl.u32 683565275, %v1075
  %v1077 = vshll.u32 683565275, %v1074
  %v1078 = vshrl.u32 2475754826, %v1075
  %v1079 = vor.u32 %v1077, %v1078
  %v1080 = vshll.u32 2475754826, %v1074
  %v1081 = vshrl.u32 2131351028, %v1075
  %v1082 = vor.u32 %v1080, %v1081
  %v1083 = vshll.u32 2131351028, %v1074
  %v1084 = vshrl.u32 2102212464, %v1075
  %v1085 = vor.u32 %v1083, %v1084
  %v1086 = vshll.u32 2102212464, %v1074
  %v1087 = vshrl.u32 920167782, %v1075
  %v1088 = vor.u32 %v1086, %v1087
  %v1089 = vshll.u32 920167782, %v1074
  %v1090 = vshrl.u32 1326507024, %v1075
  %v1091 = vor.u32 %v1089, %v1090
  %vm1092 = vcmp.lt.s32.totalorder %v1073, 1
  %vm1093 = vcmp.lt.s32.totalorder %v1073, 2
  %vm1094 = vcmp.lt.s32.totalorder %v1073, 3
  %vm1095 = vcmp.lt.s32.totalorder %v1073, 4
  %v1096 = vsel %vm1092, %v1076, %v1079
  %v1097 = vsel %vm1095, %v1085, 2102212464
  %v1098 = vsel %vm1094, %v1082, %v1097
  %v1099 = vsel %vm1093, %v1096, %v1098
  %v1100 = vsel %vm1092, %v1079, %v1082
  %v1101 = vsel %vm1095, %v1088, 920167782
  %v1102 = vsel %vm1094, %v1085, %v1101
  %v1103 = vsel %vm1093, %v1100, %v1102
  %v1104 = vsel %vm1092, %v1082, %v1085
  %v1105 = vsel %vm1095, %v1091, 1326507024
  %v1106 = vsel %vm1094, %v1088, %v1105
  %v1107 = vsel %vm1093, %v1104, %v1106
  %v1108 = vshll.u32 %v1068, 8
  %v1109 = vmul.u32.u64.compose %v1108, %v1107
  %v1110 = vextract.low.u32 %v1109
  %v1111 = vextract.high.u32 %v1109
  %v1112 = vmul.u32.u64.compose %v1108, %v1103
  %v1113 = vextract.low.u32 %v1112
  %v1114 = vextract.high.u32 %v1112
  %v1115 = vmul.u32 %v1108, %v1099
  %v1116 = vadd.s32 %v1111, %v1113
  %vm1117 = vc.u32 %v1111, %v1113
  %v1118 = vadd.s32 %v1114, 1
  %v1119 = vsel %vm1117, %v1118, %v1114
  %v1120 = vadd.s32 %v1115, %v1119
  %v1121 = vadd.s32 %v1120, 536870912
  %v1122 = vshrl.u32 %v1121, 30
  %v1123 = vshll.u32 %v1122, 30
  %v1124 = vsub.s32 %v1120, %v1123
  %vm1125 = vcmp.lt.s32.totalorder %v1124, 0
  %v1126 = vsub.s32 0, %v1124
  %v1127 = vsel %vm1125, %v1126, %v1124
  %v1128 = vclz %v1127
  %v1129 = vsub.s32 %v1128, 2
  %vm1130 = vcmp.gt.s32.totalorder 0, %v1129
  %v1131 = vsel %vm1130, 0, %v1129
  %v1132 = vsub.s32 32, %v1131
  %v1133 = vshll.u32 %v1124, %v1131
  %v1134 = vshrl.u32 %v1116, %v1132
  %v1135 = vor.u32 %v1133, %v1134
  %v1136 = vsub.s32 4294967266, %v1131
  %v1137 = vadd.s32 %v1136, 127
  %v1138 = vshll.u32 %v1137, 23
  %v1139 = vor.u32 4788187, %v1138
  %v1140 = vand.u32 2147483647, %v1139
  %v1142 = vcvt.s32.f32 %v1135
  %v1143 = vmul.f32 %v1142, %v1140
  %v1144 = vxor.u32 %v1143, 2147483648
  %v1145 = vsel %vm1062, %v1144, %v1143
  %v1146 = vsub.s32 4, %v1122
  %v1147 = vsel %vm1062, %v1146, %v1122
  %v1148 = vsel %vm1061, %v220, %v1145
  %v1149 = vsel %vm1061, 0, %v1147
  %v1150 = vcosq.f32.pop %v1148
  %v1151 = vsinq.f32.pop %v1148
  %vm1152 = vweird.f32 %v220
  %v1153 = vadd.s32 %v1149, 3
  %v1154 = vand.u32 %v1153, 3
  %vm1155 = vcmp.lt.s32.totalorder %v1154, 2
  %vm1156 = vcmp.eq.s32.totalorder %v1154, 0
  %v1157 = vxor.u32 %v1151, 2147483648
  %v1158 = vsel %vm1156, %v1150, %v1157
  %vm1159 = vcmp.eq.s32.totalorder %v1154, 2
  %v1160 = vxor.u32 %v1150, 2147483648
  %v1161 = vsel %vm1159, %v1160, %v1151
  %v1162 = vsel %vm1155, %v1158, %v1161
  %v1163 = vsel %vm1152, nan, %v1162
  %v1164 = vand.u32 2147483647, %v139
  %vm1165 = vcmp.le.f32.partialorder %v1164, 0.7853982
  %vm1166 = vcmp.lt.s32.totalorder %v139, 0
  %v1167 = vand.u32 %v139, 2139095040
  %v1168 = vshrl.u32 %v1167, 23
  %v1169 = vsub.s32 %v1168, 127
  %v1170 = vand.u32 2147483647, %v139
  %v1171 = vand.u32 %v1170, 8388607
  %v1172 = vor.u32 %v1171, 8388608
  %v1173 = vsub.s32 0, %v1172
  %v1174 = vadd.s32 %v1169, 1
  %vm1175 = vcmp.gt.s32.totalorder %v1174, 0
  %v1176 = vsel %vm1175, %v1174, 0
  %v1177 = vshrl.u32 %v1176, 5
  %v1178 = vand.u32 %v1176, 31
  %v1179 = vsub.s32 32, %v1178
  %v1180 = vshrl.u32 683565275, %v1179
  %v1181 = vshll.u32 683565275, %v1178
  %v1182 = vshrl.u32 2475754826, %v1179
  %v1183 = vor.u32 %v1181, %v1182
  %v1184 = vshll.u32 2475754826, %v1178
  %v1185 = vshrl.u32 2131351028, %v1179
  %v1186 = vor.u32 %v1184, %v1185
  %v1187 = vshll.u32 2131351028, %v1178
  %v1188 = vshrl.u32 2102212464, %v1179
  %v1189 = vor.u32 %v1187, %v1188
  %v1190 = vshll.u32 2102212464, %v1178
  %v1191 = vshrl.u32 920167782, %v1179
  %v1192 = vor.u32 %v1190, %v1191
  %v1193 = vshll.u32 920167782, %v1178
  %v1194 = vshrl.u32 1326507024, %v1179
  %v1195 = vor.u32 %v1193, %v1194
  %vm1196 = vcmp.lt.s32.totalorder %v1177, 1
  %vm1197 = vcmp.lt.s32.totalorder %v1177, 2
  %vm1198 = vcmp.lt.s32.totalorder %v1177, 3
  %vm1199 = vcmp.lt.s32.totalorder %v1177, 4
  %v1200 = vsel %vm1196, %v1180, %v1183
  %v1201 = vsel %vm1199, %v1189, 2102212464
  %v1202 = vsel %vm1198, %v1186, %v1201
  %v1203 = vsel %vm1197, %v1200, %v1202
  %v1204 = vsel %vm1196, %v1183, %v1186
  %v1205 = vsel %vm1199, %v1192, 920167782
  %v1206 = vsel %vm1198, %v1189, %v1205
  %v1207 = vsel %vm1197, %v1204, %v1206
  %v1208 = vsel %vm1196, %v1186, %v1189
  %v1209 = vsel %vm1199, %v1195, 1326507024
  %v1210 = vsel %vm1198, %v1192, %v1209
  %v1211 = vsel %vm1197, %v1208, %v1210
  %v1212 = vshll.u32 %v1172, 8
  %v1213 = vmul.u32.u64.compose %v1212, %v1211
  %v1214 = vextract.low.u32 %v1213
  %v1215 = vextract.high.u32 %v1213
  %v1216 = vmul.u32.u64.compose %v1212, %v1207
  %v1217 = vextract.low.u32 %v1216
  %v1218 = vextract.high.u32 %v1216
  %v1219 = vmul.u32 %v1212, %v1203
  %v1220 = vadd.s32 %v1215, %v1217
  %vm1221 = vc.u32 %v1215, %v1217
  %v1222 = vadd.s32 %v1218, 1
  %v1223 = vsel %vm1221, %v1222, %v1218
  %v1224 = vadd.s32 %v1219, %v1223
  %v1225 = vadd.s32 %v1224, 536870912
  %v1226 = vshrl.u32 %v1225, 30
  %v1227 = vshll.u32 %v1226, 30
  %v1228 = vsub.s32 %v1224, %v1227
  %vm1229 = vcmp.lt.s32.totalorder %v1228, 0
  %v1230 = vsub.s32 0, %v1228
  %v1231 = vsel %vm1229, %v1230, %v1228
  %v1232 = vclz %v1231
  %v1233 = vsub.s32 %v1232, 2
  %vm1234 = vcmp.gt.s32.totalorder 0, %v1233
  %v1235 = vsel %vm1234, 0, %v1233
  %v1236 = vsub.s32 32, %v1235
  %v1237 = vshll.u32 %v1228, %v1235
  %v1238 = vshrl.u32 %v1220, %v1236
  %v1239 = vor.u32 %v1237, %v1238
  %v1240 = vsub.s32 4294967266, %v1235
  %v1241 = vadd.s32 %v1240, 127
  %v1242 = vshll.u32 %v1241, 23
  %v1243 = vor.u32 4788187, %v1242
  %v1244 = vand.u32 2147483647, %v1243
  %v1246 = vcvt.s32.f32 %v1239
  %v1247 = vmul.f32 %v1246, %v1244
  %v1248 = vxor.u32 %v1247, 2147483648
  %v1249 = vsel %vm1166, %v1248, %v1247
  %v1250 = vsub.s32 4, %v1226
  %v1251 = vsel %vm1166, %v1250, %v1226
  %v1252 = vsel %vm1165, %v139, %v1249
  %v1253 = vsel %vm1165, 0, %v1251
  %v1254 = vcosq.f32.pop %v1252
  %v1255 = vsinq.f32.pop %v1252
  %vm1256 = vweird.f32 %v139
  %v1257 = vadd.s32 %v1253, 3
  %v1258 = vand.u32 %v1257, 3
  %vm1259 = vcmp.lt.s32.totalorder %v1258, 2
  %vm1260 = vcmp.eq.s32.totalorder %v1258, 0
  %v1261 = vxor.u32 %v1255, 2147483648
  %v1262 = vsel %vm1260, %v1254, %v1261
  %vm1263 = vcmp.eq.s32.totalorder %v1258, 2
  %v1264 = vxor.u32 %v1254, 2147483648
  %v1265 = vsel %vm1263, %v1264, %v1255
  %v1266 = vsel %vm1259, %v1262, %v1265
  %v1267 = vsel %vm1256, nan, %v1266
  %v1268 = vand.u32 2147483647, %v141
  %vm1269 = vcmp.le.f32.partialorder %v1268, 0.7853982
  %vm1270 = vcmp.lt.s32.totalorder %v141, 0
  %v1271 = vand.u32 %v141, 2139095040
  %v1272 = vshrl.u32 %v1271, 23
  %v1273 = vsub.s32 %v1272, 127
  %v1274 = vand.u32 2147483647, %v141
  %v1275 = vand.u32 %v1274, 8388607
  %v1276 = vor.u32 %v1275, 8388608
  %v1277 = vsub.s32 0, %v1276
  %v1278 = vadd.s32 %v1273, 1
  %vm1279 = vcmp.gt.s32.totalorder %v1278, 0
  %v1280 = vsel %vm1279, %v1278, 0
  %v1281 = vshrl.u32 %v1280, 5
  %v1282 = vand.u32 %v1280, 31
  %v1283 = vsub.s32 32, %v1282
  %v1284 = vshrl.u32 683565275, %v1283
  %v1285 = vshll.u32 683565275, %v1282
  %v1286 = vshrl.u32 2475754826, %v1283
  %v1287 = vor.u32 %v1285, %v1286
  %v1288 = vshll.u32 2475754826, %v1282
  %v1289 = vshrl.u32 2131351028, %v1283
  %v1290 = vor.u32 %v1288, %v1289
  %v1291 = vshll.u32 2131351028, %v1282
  %v1292 = vshrl.u32 2102212464, %v1283
  %v1293 = vor.u32 %v1291, %v1292
  %v1294 = vshll.u32 2102212464, %v1282
  %v1295 = vshrl.u32 920167782, %v1283
  %v1296 = vor.u32 %v1294, %v1295
  %v1297 = vshll.u32 920167782, %v1282
  %v1298 = vshrl.u32 1326507024, %v1283
  %v1299 = vor.u32 %v1297, %v1298
  %vm1300 = vcmp.lt.s32.totalorder %v1281, 1
  %vm1301 = vcmp.lt.s32.totalorder %v1281, 2
  %vm1302 = vcmp.lt.s32.totalorder %v1281, 3
  %vm1303 = vcmp.lt.s32.totalorder %v1281, 4
  %v1304 = vsel %vm1300, %v1284, %v1287
  %v1305 = vsel %vm1303, %v1293, 2102212464
  %v1306 = vsel %vm1302, %v1290, %v1305
  %v1307 = vsel %vm1301, %v1304, %v1306
  %v1308 = vsel %vm1300, %v1287, %v1290
  %v1309 = vsel %vm1303, %v1296, 920167782
  %v1310 = vsel %vm1302, %v1293, %v1309
  %v1311 = vsel %vm1301, %v1308, %v1310
  %v1312 = vsel %vm1300, %v1290, %v1293
  %v1313 = vsel %vm1303, %v1299, 1326507024
  %v1314 = vsel %vm1302, %v1296, %v1313
  %v1315 = vsel %vm1301, %v1312, %v1314
  %v1316 = vshll.u32 %v1276, 8
  %v1317 = vmul.u32.u64.compose %v1316, %v1315
  %v1318 = vextract.low.u32 %v1317
  %v1319 = vextract.high.u32 %v1317
  %v1320 = vmul.u32.u64.compose %v1316, %v1311
  %v1321 = vextract.low.u32 %v1320
  %v1322 = vextract.high.u32 %v1320
  %v1323 = vmul.u32 %v1316, %v1307
  %v1324 = vadd.s32 %v1319, %v1321
  %vm1325 = vc.u32 %v1319, %v1321
  %v1326 = vadd.s32 %v1322, 1
  %v1327 = vsel %vm1325, %v1326, %v1322
  %v1328 = vadd.s32 %v1323, %v1327
  %v1329 = vadd.s32 %v1328, 536870912
  %v1330 = vshrl.u32 %v1329, 30
  %v1331 = vshll.u32 %v1330, 30
  %v1332 = vsub.s32 %v1328, %v1331
  %vm1333 = vcmp.lt.s32.totalorder %v1332, 0
  %v1334 = vsub.s32 0, %v1332
  %v1335 = vsel %vm1333, %v1334, %v1332
  %v1336 = vclz %v1335
  %v1337 = vsub.s32 %v1336, 2
  %vm1338 = vcmp.gt.s32.totalorder 0, %v1337
  %v1339 = vsel %vm1338, 0, %v1337
  %v1340 = vsub.s32 32, %v1339
  %v1341 = vshll.u32 %v1332, %v1339
  %v1342 = vshrl.u32 %v1324, %v1340
  %v1343 = vor.u32 %v1341, %v1342
  %v1344 = vsub.s32 4294967266, %v1339
  %v1345 = vadd.s32 %v1344, 127
  %v1346 = vshll.u32 %v1345, 23
  %v1347 = vor.u32 4788187, %v1346
  %v1348 = vand.u32 2147483647, %v1347
  %v1350 = vcvt.s32.f32 %v1343
  %v1351 = vmul.f32 %v1350, %v1348
  %v1352 = vxor.u32 %v1351, 2147483648
  %v1353 = vsel %vm1270, %v1352, %v1351
  %v1354 = vsub.s32 4, %v1330
  %v1355 = vsel %vm1270, %v1354, %v1330
  %v1356 = vsel %vm1269, %v141, %v1353
  %v1357 = vsel %vm1269, 0, %v1355
  %v1358 = vcosq.f32.pop %v1356
  %v1359 = vsinq.f32.pop %v1356
  %vm1360 = vweird.f32 %v141
  %v1361 = vadd.s32 %v1357, 3
  %v1362 = vand.u32 %v1361, 3
  %vm1363 = vcmp.lt.s32.totalorder %v1362, 2
  %vm1364 = vcmp.eq.s32.totalorder %v1362, 0
  %v1365 = vxor.u32 %v1359, 2147483648
  %v1366 = vsel %vm1364, %v1358, %v1365
  %vm1367 = vcmp.eq.s32.totalorder %v1362, 2
  %v1368 = vxor.u32 %v1358, 2147483648
  %v1369 = vsel %vm1367, %v1368, %v1359
  %v1370 = vsel %vm1363, %v1366, %v1369
  %v1371 = vsel %vm1360, nan, %v1370
  %v1372 = vand.u32 2147483647, %v225
  %vm1373 = vcmp.le.f32.partialorder %v1372, 0.7853982
  %vm1374 = vcmp.lt.s32.totalorder %v225, 0
  %v1375 = vand.u32 %v225, 2139095040
  %v1376 = vshrl.u32 %v1375, 23
  %v1377 = vsub.s32 %v1376, 127
  %v1378 = vand.u32 2147483647, %v225
  %v1379 = vand.u32 %v1378, 8388607
  %v1380 = vor.u32 %v1379, 8388608
  %v1381 = vsub.s32 0, %v1380
  %v1382 = vadd.s32 %v1377, 1
  %vm1383 = vcmp.gt.s32.totalorder %v1382, 0
  %v1384 = vsel %vm1383, %v1382, 0
  %v1385 = vshrl.u32 %v1384, 5
  %v1386 = vand.u32 %v1384, 31
  %v1387 = vsub.s32 32, %v1386
  %v1388 = vshrl.u32 683565275, %v1387
  %v1389 = vshll.u32 683565275, %v1386
  %v1390 = vshrl.u32 2475754826, %v1387
  %v1391 = vor.u32 %v1389, %v1390
  %v1392 = vshll.u32 2475754826, %v1386
  %v1393 = vshrl.u32 2131351028, %v1387
  %v1394 = vor.u32 %v1392, %v1393
  %v1395 = vshll.u32 2131351028, %v1386
  %v1396 = vshrl.u32 2102212464, %v1387
  %v1397 = vor.u32 %v1395, %v1396
  %v1398 = vshll.u32 2102212464, %v1386
  %v1399 = vshrl.u32 920167782, %v1387
  %v1400 = vor.u32 %v1398, %v1399
  %v1401 = vshll.u32 920167782, %v1386
  %v1402 = vshrl.u32 1326507024, %v1387
  %v1403 = vor.u32 %v1401, %v1402
  %vm1404 = vcmp.lt.s32.totalorder %v1385, 1
  %vm1405 = vcmp.lt.s32.totalorder %v1385, 2
  %vm1406 = vcmp.lt.s32.totalorder %v1385, 3
  %vm1407 = vcmp.lt.s32.totalorder %v1385, 4
  %v1408 = vsel %vm1404, %v1388, %v1391
  %v1409 = vsel %vm1407, %v1397, 2102212464
  %v1410 = vsel %vm1406, %v1394, %v1409
  %v1411 = vsel %vm1405, %v1408, %v1410
  %v1412 = vsel %vm1404, %v1391, %v1394
  %v1413 = vsel %vm1407, %v1400, 920167782
  %v1414 = vsel %vm1406, %v1397, %v1413
  %v1415 = vsel %vm1405, %v1412, %v1414
  %v1416 = vsel %vm1404, %v1394, %v1397
  %v1417 = vsel %vm1407, %v1403, 1326507024
  %v1418 = vsel %vm1406, %v1400, %v1417
  %v1419 = vsel %vm1405, %v1416, %v1418
  %v1420 = vshll.u32 %v1380, 8
  %v1421 = vmul.u32.u64.compose %v1420, %v1419
  %v1422 = vextract.low.u32 %v1421
  %v1423 = vextract.high.u32 %v1421
  %v1424 = vmul.u32.u64.compose %v1420, %v1415
  %v1425 = vextract.low.u32 %v1424
  %v1426 = vextract.high.u32 %v1424
  %v1427 = vmul.u32 %v1420, %v1411
  %v1428 = vadd.s32 %v1423, %v1425
  %vm1429 = vc.u32 %v1423, %v1425
  %v1430 = vadd.s32 %v1426, 1
  %v1431 = vsel %vm1429, %v1430, %v1426
  %v1432 = vadd.s32 %v1427, %v1431
  %v1433 = vadd.s32 %v1432, 536870912
  %v1434 = vshrl.u32 %v1433, 30
  %v1435 = vshll.u32 %v1434, 30
  %v1436 = vsub.s32 %v1432, %v1435
  %vm1437 = vcmp.lt.s32.totalorder %v1436, 0
  %v1438 = vsub.s32 0, %v1436
  %v1439 = vsel %vm1437, %v1438, %v1436
  %v1440 = vclz %v1439
  %v1441 = vsub.s32 %v1440, 2
  %vm1442 = vcmp.gt.s32.totalorder 0, %v1441
  %v1443 = vsel %vm1442, 0, %v1441
  %v1444 = vsub.s32 32, %v1443
  %v1445 = vshll.u32 %v1436, %v1443
  %v1446 = vshrl.u32 %v1428, %v1444
  %v1447 = vor.u32 %v1445, %v1446
  %v1448 = vsub.s32 4294967266, %v1443
  %v1449 = vadd.s32 %v1448, 127
  %v1450 = vshll.u32 %v1449, 23
  %v1451 = vor.u32 4788187, %v1450
  %v1452 = vand.u32 2147483647, %v1451
  %v1454 = vcvt.s32.f32 %v1447
  %v1455 = vmul.f32 %v1454, %v1452
  %v1456 = vxor.u32 %v1455, 2147483648
  %v1457 = vsel %vm1374, %v1456, %v1455
  %v1458 = vsub.s32 4, %v1434
  %v1459 = vsel %vm1374, %v1458, %v1434
  %v1460 = vsel %vm1373, %v225, %v1457
  %v1461 = vsel %vm1373, 0, %v1459
  %v1462 = vcosq.f32.pop %v1460
  %v1463 = vsinq.f32.pop %v1460
  %vm1464 = vweird.f32 %v225
  %v1465 = vadd.s32 %v1461, 3
  %v1466 = vand.u32 %v1465, 3
  %vm1467 = vcmp.lt.s32.totalorder %v1466, 2
  %vm1468 = vcmp.eq.s32.totalorder %v1466, 0
  %v1469 = vxor.u32 %v1463, 2147483648
  %v1470 = vsel %vm1468, %v1462, %v1469
  %vm1471 = vcmp.eq.s32.totalorder %v1466, 2
  %v1472 = vxor.u32 %v1462, 2147483648
  %v1473 = vsel %vm1471, %v1472, %v1463
  %v1474 = vsel %vm1467, %v1470, %v1473
  %v1475 = vsel %vm1464, nan, %v1474
  %v1476 = vld [vmem:[%s2] sm:$0xff]
  %v1477 = vld [vmem:[%s2 + $0x8] sm:$0xff]
  %v1478 = vld [vmem:[%s2 + $0x10] sm:$0xff]
  %v1479 = vld [vmem:[%s2 + $0x18] sm:$0xff]
  %v1480 = vld [vmem:[%s3] sm:$0xff]
  %v1481 = vld [vmem:[%s3 + $0x8] sm:$0xff]
  %v1482 = vld [vmem:[%s3 + $0x10] sm:$0xff]
  %v1483 = vld [vmem:[%s3 + $0x18] sm:$0xff]
  %1485 = vset.pattern.permute.xlu0 0
  %1486 = vperm.xlu0 %1485, %v1480
  %v1487 = vpop.permute.xlu0 %1486
  %1490 = vset.pattern.permute.xlu0 0
  %1491 = vperm.xlu0 %1490, %v1481
  %v1492 = vpop.permute.xlu0 %1491
  %1495 = vset.pattern.permute.xlu0 0
  %1496 = vperm.xlu0 %1495, %v1482
  %v1497 = vpop.permute.xlu0 %1496
  %1500 = vset.pattern.permute.xlu0 0
  %1501 = vperm.xlu0 %1500, %v1483
  %v1502 = vpop.permute.xlu0 %1501
  %vm1504 = vcmask 261120
  %v1506 = vsel %vm1504, %v1476, 0
  %v1509 = vsel %vm1504, %v1477, 0
  %v1512 = vsel %vm1504, %v1478, 0
  %v1515 = vsel %vm1504, %v1479, 0
  %1517 = vmatprep.subr.mxu0 0.0
  %1518 = vmatpush1.msra.mxu0 0.0
  %1519 = vmatprep.subr.mxu0 0.0
  %1520 = vmatpush1.msra.mxu0 0.0
  %1521 = vmatprep.subr.mxu0 0.0
  %1522 = vmatpush1.msra.mxu0 0.0
  %1523 = vmatprep.subr.mxu0 0.0
  %1524 = vmatpush1.msra.mxu0 0.0
  %1525 = vmatprep.subr.mxu0 0.0
  %1526 = vmatpush1.msra.mxu0 0.0
  %1527 = vmatprep.subr.mxu0 0.0
  %1528 = vmatpush1.msra.mxu0 0.0
  %1529 = vmatprep.subr.mxu0 0.0
  %1530 = vmatpush1.msra.mxu0 0.0
  %1531 = vmatprep.subr.mxu0 0.0
  %1532 = vmatpush1.msra.mxu0 0.0
  %1533 = vmatprep.subr.mxu0 0.0
  %1534 = vmatpush1.msra.mxu0 0.0
  %1535 = vmatprep.subr.mxu0 0.0
  %1536 = vmatpush1.msra.mxu0 0.0
  %1537 = vmatprep.subr.mxu0 0.0
  %1538 = vmatpush1.msra.mxu0 0.0
  %1539 = vmatprep.subr.mxu0 0.0
  %1540 = vmatpush1.msra.mxu0 0.0
  %1541 = vmatprep.subr.mxu0 %v1371
  %1542 = vmatpush1.msra.mxu0 %v1267
  %1543 = vmatprep.subr.mxu0 %v1059
  %1544 = vmatpush1.msra.mxu0 %v955
  %1545 = vmatprep.subr.mxu0 %v747
  %1546 = vmatpush1.msra.mxu0 %v643
  %1547 = vmatprep.subr.mxu0 %v435
  %1548 = vmatpush1.msra.mxu0 %v331
  %1549 = vmatprep.subr.mxu0 0.0
  %1550 = vmatpush2.msra.mxu0 0.0
  %1551 = vmatprep.subr.mxu0 0.0
  %1552 = vmatpush2.msra.mxu0 0.0
  %1553 = vmatprep.subr.mxu0 0.0
  %1554 = vmatpush2.msra.mxu0 0.0
  %1555 = vmatprep.subr.mxu0 0.0
  %1556 = vmatpush2.msra.mxu0 0.0
  %1557 = vmatprep.subr.mxu0 0.0
  %1558 = vmatpush2.msra.mxu0 0.0
  %1559 = vmatprep.subr.mxu0 0.0
  %1560 = vmatpush2.msra.mxu0 0.0
  %1561 = vmatprep.subr.mxu0 0.0
  %1562 = vmatpush2.msra.mxu0 0.0
  %1563 = vmatprep.subr.mxu0 0.0
  %1564 = vmatpush2.msra.mxu0 0.0
  %1565 = vmatprep.subr.mxu0 0.0
  %1566 = vmatpush2.msra.mxu0 0.0
  %1567 = vmatprep.subr.mxu0 0.0
  %1568 = vmatpush2.msra.mxu0 0.0
  %1569 = vmatprep.subr.mxu0 0.0
  %1570 = vmatpush2.msra.mxu0 0.0
  %1571 = vmatprep.subr.mxu0 0.0
  %1572 = vmatpush2.msra.mxu0 0.0
  %1573 = vmatprep.subr.mxu0 0.0
  %1574 = vmatpush2.msra.mxu0 0.0
  %1575 = vmatprep.subr.mxu0 0.0
  %1576 = vmatpush2.msra.mxu0 0.0
  %1577 = vmatprep.subr.mxu0 0.0
  %1578 = vmatpush2.msra.mxu0 0.0
  %1579 = vmatprep.subr.mxu0 0.0
  %1580 = vmatpush2.msra.mxu0 0.0
  %1581 = vmatprep.mubr.f32.mxu0 0.0
  %1582 = vmatmul.mubr.f32.gmra.mxu0 %v1506
  %v1583 = vpop.f32.mrf.mxu0
  %v1584 = vadd.f32 %v1487, %v1583
  %v1585 = vpop.f32.mrf.mxu0
  %v1586 = vadd.f32 %v1487, %v1585
  %1587 = vmatprep.mubr.f32.mxu0 0.0
  %1588 = vmatmul.mubr.f32.gmra.mxu0 %v1509
  %v1589 = vpop.f32.mrf.mxu0
  %v1590 = vadd.f32 %v1492, %v1589
  %v1591 = vpop.f32.mrf.mxu0
  %v1592 = vadd.f32 %v1492, %v1591
  %1593 = vmatprep.mubr.f32.mxu0 0.0
  %1594 = vmatmul.mubr.f32.gmra.mxu0 %v1512
  %v1595 = vpop.f32.mrf.mxu0
  %v1596 = vadd.f32 %v1497, %v1595
  %v1597 = vpop.f32.mrf.mxu0
  %v1598 = vadd.f32 %v1497, %v1597
  %1599 = vmatprep.mubr.f32.mxu0 0.0
  %1600 = vmatmul.mubr.f32.gmra.mxu0 %v1515
  %v1601 = vpop.f32.mrf.mxu0
  %v1602 = vadd.f32 %v1502, %v1601
  %v1603 = vpop.f32.mrf.mxu0
  %v1604 = vadd.f32 %v1502, %v1603
  %1605 = vdwg.mxu0
  %1606 = vmatprep.subr.mxu0 0.0
  %1607 = vmatpush1.msra.mxu0 0.0
  %1608 = vmatprep.subr.mxu0 0.0
  %1609 = vmatpush1.msra.mxu0 0.0
  %1610 = vmatprep.subr.mxu0 0.0
  %1611 = vmatpush1.msra.mxu0 0.0
  %1612 = vmatprep.subr.mxu0 0.0
  %1613 = vmatpush1.msra.mxu0 0.0
  %1614 = vmatprep.subr.mxu0 0.0
  %1615 = vmatpush1.msra.mxu0 0.0
  %1616 = vmatprep.subr.mxu0 0.0
  %1617 = vmatpush1.msra.mxu0 0.0
  %1618 = vmatprep.subr.mxu0 0.0
  %1619 = vmatpush1.msra.mxu0 0.0
  %1620 = vmatprep.subr.mxu0 0.0
  %1621 = vmatpush1.msra.mxu0 0.0
  %1622 = vmatprep.subr.mxu0 0.0
  %1623 = vmatpush1.msra.mxu0 0.0
  %1624 = vmatprep.subr.mxu0 0.0
  %1625 = vmatpush1.msra.mxu0 0.0
  %1626 = vmatprep.subr.mxu0 0.0
  %1627 = vmatpush1.msra.mxu0 0.0
  %1628 = vmatprep.subr.mxu0 0.0
  %1629 = vmatpush1.msra.mxu0 0.0
  %1630 = vmatprep.subr.mxu0 0.0
  %1631 = vmatpush1.msra.mxu0 %v1475
  %1632 = vmatprep.subr.mxu0 0.0
  %1633 = vmatpush1.msra.mxu0 %v1163
  %1634 = vmatprep.subr.mxu0 0.0
  %1635 = vmatpush1.msra.mxu0 %v851
  %1636 = vmatprep.subr.mxu0 0.0
  %1637 = vmatpush1.msra.mxu0 %v539
  %1638 = vmatprep.subr.mxu0 0.0
  %1639 = vmatpush2.msra.mxu0 0.0
  %1640 = vmatprep.subr.mxu0 0.0
  %1641 = vmatpush2.msra.mxu0 0.0
  %1642 = vmatprep.subr.mxu0 0.0
  %1643 = vmatpush2.msra.mxu0 0.0
  %1644 = vmatprep.subr.mxu0 0.0
  %1645 = vmatpush2.msra.mxu0 0.0
  %1646 = vmatprep.subr.mxu0 0.0
  %1647 = vmatpush2.msra.mxu0 0.0
  %1648 = vmatprep.subr.mxu0 0.0
  %1649 = vmatpush2.msra.mxu0 0.0
  %1650 = vmatprep.subr.mxu0 0.0
  %1651 = vmatpush2.msra.mxu0 0.0
  %1652 = vmatprep.subr.mxu0 0.0
  %1653 = vmatpush2.msra.mxu0 0.0
  %1654 = vmatprep.subr.mxu0 0.0
  %1655 = vmatpush2.msra.mxu0 0.0
  %1656 = vmatprep.subr.mxu0 0.0
  %1657 = vmatpush2.msra.mxu0 0.0
  %1658 = vmatprep.subr.mxu0 0.0
  %1659 = vmatpush2.msra.mxu0 0.0
  %1660 = vmatprep.subr.mxu0 0.0
  %1661 = vmatpush2.msra.mxu0 0.0
  %1662 = vmatprep.subr.mxu0 0.0
  %1663 = vmatpush2.msra.mxu0 0.0
  %1664 = vmatprep.subr.mxu0 0.0
  %1665 = vmatpush2.msra.mxu0 0.0
  %1666 = vmatprep.subr.mxu0 0.0
  %1667 = vmatpush2.msra.mxu0 0.0
  %1668 = vmatprep.subr.mxu0 0.0
  %1669 = vmatpush2.msra.mxu0 0.0
  %1670 = vmatprep.mubr.f32.mxu0 0.0
  %1671 = vmatmul.mubr.f32.gmra.mxu0 %v1506
  %v1672 = vpop.f32.mrf.mxu0
  %v1673 = vadd.f32 %v1487, %v1672
  %v1674 = vpop.f32.mrf.mxu0
  %1675 = vmatprep.mubr.f32.mxu0 0.0
  %1676 = vmatmul.mubr.f32.gmra.mxu0 %v1509
  %v1677 = vpop.f32.mrf.mxu0
  %v1678 = vadd.f32 %v1492, %v1677
  %v1679 = vpop.f32.mrf.mxu0
  %1680 = vmatprep.mubr.f32.mxu0 0.0
  %1681 = vmatmul.mubr.f32.gmra.mxu0 %v1512
  %v1682 = vpop.f32.mrf.mxu0
  %v1683 = vadd.f32 %v1497, %v1682
  %v1684 = vpop.f32.mrf.mxu0
  %1685 = vmatprep.mubr.f32.mxu0 0.0
  %1686 = vmatmul.mubr.f32.gmra.mxu0 %v1515
  %v1687 = vpop.f32.mrf.mxu0
  %v1688 = vadd.f32 %v1502, %v1687
  %v1689 = vpop.f32.mrf.mxu0
  %1690 = vdwg.mxu0
  %v1691 = vand.u32 2147483647, %v1584
  %vm1692 = vcmp.le.f32.partialorder %v1691, 0.7853982
  %vm1693 = vcmp.lt.s32.totalorder %v1584, 0
  %v1694 = vand.u32 %v1584, 2139095040
  %v1695 = vshrl.u32 %v1694, 23
  %v1696 = vsub.s32 %v1695, 127
  %v1697 = vand.u32 2147483647, %v1584
  %v1698 = vand.u32 %v1697, 8388607
  %v1699 = vor.u32 %v1698, 8388608
  %v1700 = vsub.s32 0, %v1699
  %v1701 = vadd.s32 %v1696, 1
  %vm1702 = vcmp.gt.s32.totalorder %v1701, 0
  %v1703 = vsel %vm1702, %v1701, 0
  %v1704 = vshrl.u32 %v1703, 5
  %v1705 = vand.u32 %v1703, 31
  %v1706 = vsub.s32 32, %v1705
  %v1707 = vshrl.u32 683565275, %v1706
  %v1708 = vshll.u32 683565275, %v1705
  %v1709 = vshrl.u32 2475754826, %v1706
  %v1710 = vor.u32 %v1708, %v1709
  %v1711 = vshll.u32 2475754826, %v1705
  %v1712 = vshrl.u32 2131351028, %v1706
  %v1713 = vor.u32 %v1711, %v1712
  %v1714 = vshll.u32 2131351028, %v1705
  %v1715 = vshrl.u32 2102212464, %v1706
  %v1716 = vor.u32 %v1714, %v1715
  %v1717 = vshll.u32 2102212464, %v1705
  %v1718 = vshrl.u32 920167782, %v1706
  %v1719 = vor.u32 %v1717, %v1718
  %v1720 = vshll.u32 920167782, %v1705
  %v1721 = vshrl.u32 1326507024, %v1706
  %v1722 = vor.u32 %v1720, %v1721
  %vm1723 = vcmp.lt.s32.totalorder %v1704, 1
  %vm1724 = vcmp.lt.s32.totalorder %v1704, 2
  %vm1725 = vcmp.lt.s32.totalorder %v1704, 3
  %vm1726 = vcmp.lt.s32.totalorder %v1704, 4
  %v1727 = vsel %vm1723, %v1707, %v1710
  %v1728 = vsel %vm1726, %v1716, 2102212464
  %v1729 = vsel %vm1725, %v1713, %v1728
  %v1730 = vsel %vm1724, %v1727, %v1729
  %v1731 = vsel %vm1723, %v1710, %v1713
  %v1732 = vsel %vm1726, %v1719, 920167782
  %v1733 = vsel %vm1725, %v1716, %v1732
  %v1734 = vsel %vm1724, %v1731, %v1733
  %v1735 = vsel %vm1723, %v1713, %v1716
  %v1736 = vsel %vm1726, %v1722, 1326507024
  %v1737 = vsel %vm1725, %v1719, %v1736
  %v1738 = vsel %vm1724, %v1735, %v1737
  %v1739 = vshll.u32 %v1699, 8
  %v1740 = vmul.u32.u64.compose %v1739, %v1738
  %v1741 = vextract.low.u32 %v1740
  %v1742 = vextract.high.u32 %v1740
  %v1743 = vmul.u32.u64.compose %v1739, %v1734
  %v1744 = vextract.low.u32 %v1743
  %v1745 = vextract.high.u32 %v1743
  %v1746 = vmul.u32 %v1739, %v1730
  %v1747 = vadd.s32 %v1742, %v1744
  %vm1748 = vc.u32 %v1742, %v1744
  %v1749 = vadd.s32 %v1745, 1
  %v1750 = vsel %vm1748, %v1749, %v1745
  %v1751 = vadd.s32 %v1746, %v1750
  %v1752 = vadd.s32 %v1751, 536870912
  %v1753 = vshrl.u32 %v1752, 30
  %v1754 = vshll.u32 %v1753, 30
  %v1755 = vsub.s32 %v1751, %v1754
  %vm1756 = vcmp.lt.s32.totalorder %v1755, 0
  %v1757 = vsub.s32 0, %v1755
  %v1758 = vsel %vm1756, %v1757, %v1755
  %v1759 = vclz %v1758
  %v1760 = vsub.s32 %v1759, 2
  %vm1761 = vcmp.gt.s32.totalorder 0, %v1760
  %v1762 = vsel %vm1761, 0, %v1760
  %v1763 = vsub.s32 32, %v1762
  %v1764 = vshll.u32 %v1755, %v1762
  %v1765 = vshrl.u32 %v1747, %v1763
  %v1766 = vor.u32 %v1764, %v1765
  %v1767 = vsub.s32 4294967266, %v1762
  %v1768 = vadd.s32 %v1767, 127
  %v1769 = vshll.u32 %v1768, 23
  %v1770 = vor.u32 4788187, %v1769
  %v1771 = vand.u32 2147483647, %v1770
  %v1773 = vcvt.s32.f32 %v1766
  %v1774 = vmul.f32 %v1773, %v1771
  %v1775 = vxor.u32 %v1774, 2147483648
  %v1776 = vsel %vm1693, %v1775, %v1774
  %v1777 = vsub.s32 4, %v1753
  %v1778 = vsel %vm1693, %v1777, %v1753
  %v1779 = vsel %vm1692, %v1584, %v1776
  %v1780 = vsel %vm1692, 0, %v1778
  %v1781 = vcosq.f32.pop %v1779
  %v1782 = vsinq.f32.pop %v1779
  %vm1783 = vweird.f32 %v1584
  %v1784 = vadd.s32 %v1780, 3
  %v1785 = vand.u32 %v1784, 3
  %vm1786 = vcmp.lt.s32.totalorder %v1785, 2
  %vm1787 = vcmp.eq.s32.totalorder %v1785, 0
  %v1788 = vxor.u32 %v1782, 2147483648
  %v1789 = vsel %vm1787, %v1781, %v1788
  %vm1790 = vcmp.eq.s32.totalorder %v1785, 2
  %v1791 = vxor.u32 %v1781, 2147483648
  %v1792 = vsel %vm1790, %v1791, %v1782
  %v1793 = vsel %vm1786, %v1789, %v1792
  %v1794 = vsel %vm1783, nan, %v1793
  %v1795 = vand.u32 2147483647, %v1586
  %vm1796 = vcmp.le.f32.partialorder %v1795, 0.7853982
  %vm1797 = vcmp.lt.s32.totalorder %v1586, 0
  %v1798 = vand.u32 %v1586, 2139095040
  %v1799 = vshrl.u32 %v1798, 23
  %v1800 = vsub.s32 %v1799, 127
  %v1801 = vand.u32 2147483647, %v1586
  %v1802 = vand.u32 %v1801, 8388607
  %v1803 = vor.u32 %v1802, 8388608
  %v1804 = vsub.s32 0, %v1803
  %v1805 = vadd.s32 %v1800, 1
  %vm1806 = vcmp.gt.s32.totalorder %v1805, 0
  %v1807 = vsel %vm1806, %v1805, 0
  %v1808 = vshrl.u32 %v1807, 5
  %v1809 = vand.u32 %v1807, 31
  %v1810 = vsub.s32 32, %v1809
  %v1811 = vshrl.u32 683565275, %v1810
  %v1812 = vshll.u32 683565275, %v1809
  %v1813 = vshrl.u32 2475754826, %v1810
  %v1814 = vor.u32 %v1812, %v1813
  %v1815 = vshll.u32 2475754826, %v1809
  %v1816 = vshrl.u32 2131351028, %v1810
  %v1817 = vor.u32 %v1815, %v1816
  %v1818 = vshll.u32 2131351028, %v1809
  %v1819 = vshrl.u32 2102212464, %v1810
  %v1820 = vor.u32 %v1818, %v1819
  %v1821 = vshll.u32 2102212464, %v1809
  %v1822 = vshrl.u32 920167782, %v1810
  %v1823 = vor.u32 %v1821, %v1822
  %v1824 = vshll.u32 920167782, %v1809
  %v1825 = vshrl.u32 1326507024, %v1810
  %v1826 = vor.u32 %v1824, %v1825
  %vm1827 = vcmp.lt.s32.totalorder %v1808, 1
  %vm1828 = vcmp.lt.s32.totalorder %v1808, 2
  %vm1829 = vcmp.lt.s32.totalorder %v1808, 3
  %vm1830 = vcmp.lt.s32.totalorder %v1808, 4
  %v1831 = vsel %vm1827, %v1811, %v1814
  %v1832 = vsel %vm1830, %v1820, 2102212464
  %v1833 = vsel %vm1829, %v1817, %v1832
  %v1834 = vsel %vm1828, %v1831, %v1833
  %v1835 = vsel %vm1827, %v1814, %v1817
  %v1836 = vsel %vm1830, %v1823, 920167782
  %v1837 = vsel %vm1829, %v1820, %v1836
  %v1838 = vsel %vm1828, %v1835, %v1837
  %v1839 = vsel %vm1827, %v1817, %v1820
  %v1840 = vsel %vm1830, %v1826, 1326507024
  %v1841 = vsel %vm1829, %v1823, %v1840
  %v1842 = vsel %vm1828, %v1839, %v1841
  %v1843 = vshll.u32 %v1803, 8
  %v1844 = vmul.u32.u64.compose %v1843, %v1842
  %v1845 = vextract.low.u32 %v1844
  %v1846 = vextract.high.u32 %v1844
  %v1847 = vmul.u32.u64.compose %v1843, %v1838
  %v1848 = vextract.low.u32 %v1847
  %v1849 = vextract.high.u32 %v1847
  %v1850 = vmul.u32 %v1843, %v1834
  %v1851 = vadd.s32 %v1846, %v1848
  %vm1852 = vc.u32 %v1846, %v1848
  %v1853 = vadd.s32 %v1849, 1
  %v1854 = vsel %vm1852, %v1853, %v1849
  %v1855 = vadd.s32 %v1850, %v1854
  %v1856 = vadd.s32 %v1855, 536870912
  %v1857 = vshrl.u32 %v1856, 30
  %v1858 = vshll.u32 %v1857, 30
  %v1859 = vsub.s32 %v1855, %v1858
  %vm1860 = vcmp.lt.s32.totalorder %v1859, 0
  %v1861 = vsub.s32 0, %v1859
  %v1862 = vsel %vm1860, %v1861, %v1859
  %v1863 = vclz %v1862
  %v1864 = vsub.s32 %v1863, 2
  %vm1865 = vcmp.gt.s32.totalorder 0, %v1864
  %v1866 = vsel %vm1865, 0, %v1864
  %v1867 = vsub.s32 32, %v1866
  %v1868 = vshll.u32 %v1859, %v1866
  %v1869 = vshrl.u32 %v1851, %v1867
  %v1870 = vor.u32 %v1868, %v1869
  %v1871 = vsub.s32 4294967266, %v1866
  %v1872 = vadd.s32 %v1871, 127
  %v1873 = vshll.u32 %v1872, 23
  %v1874 = vor.u32 4788187, %v1873
  %v1875 = vand.u32 2147483647, %v1874
  %v1877 = vcvt.s32.f32 %v1870
  %v1878 = vmul.f32 %v1877, %v1875
  %v1879 = vxor.u32 %v1878, 2147483648
  %v1880 = vsel %vm1797, %v1879, %v1878
  %v1881 = vsub.s32 4, %v1857
  %v1882 = vsel %vm1797, %v1881, %v1857
  %v1883 = vsel %vm1796, %v1586, %v1880
  %v1884 = vsel %vm1796, 0, %v1882
  %v1885 = vcosq.f32.pop %v1883
  %v1886 = vsinq.f32.pop %v1883
  %vm1887 = vweird.f32 %v1586
  %v1888 = vadd.s32 %v1884, 3
  %v1889 = vand.u32 %v1888, 3
  %vm1890 = vcmp.lt.s32.totalorder %v1889, 2
  %vm1891 = vcmp.eq.s32.totalorder %v1889, 0
  %v1892 = vxor.u32 %v1886, 2147483648
  %v1893 = vsel %vm1891, %v1885, %v1892
  %vm1894 = vcmp.eq.s32.totalorder %v1889, 2
  %v1895 = vxor.u32 %v1885, 2147483648
  %v1896 = vsel %vm1894, %v1895, %v1886
  %v1897 = vsel %vm1890, %v1893, %v1896
  %v1898 = vsel %vm1887, nan, %v1897
  %v1899 = vand.u32 2147483647, %v1673
  %vm1900 = vcmp.le.f32.partialorder %v1899, 0.7853982
  %vm1901 = vcmp.lt.s32.totalorder %v1673, 0
  %v1902 = vand.u32 %v1673, 2139095040
  %v1903 = vshrl.u32 %v1902, 23
  %v1904 = vsub.s32 %v1903, 127
  %v1905 = vand.u32 2147483647, %v1673
  %v1906 = vand.u32 %v1905, 8388607
  %v1907 = vor.u32 %v1906, 8388608
  %v1908 = vsub.s32 0, %v1907
  %v1909 = vadd.s32 %v1904, 1
  %vm1910 = vcmp.gt.s32.totalorder %v1909, 0
  %v1911 = vsel %vm1910, %v1909, 0
  %v1912 = vshrl.u32 %v1911, 5
  %v1913 = vand.u32 %v1911, 31
  %v1914 = vsub.s32 32, %v1913
  %v1915 = vshrl.u32 683565275, %v1914
  %v1916 = vshll.u32 683565275, %v1913
  %v1917 = vshrl.u32 2475754826, %v1914
  %v1918 = vor.u32 %v1916, %v1917
  %v1919 = vshll.u32 2475754826, %v1913
  %v1920 = vshrl.u32 2131351028, %v1914
  %v1921 = vor.u32 %v1919, %v1920
  %v1922 = vshll.u32 2131351028, %v1913
  %v1923 = vshrl.u32 2102212464, %v1914
  %v1924 = vor.u32 %v1922, %v1923
  %v1925 = vshll.u32 2102212464, %v1913
  %v1926 = vshrl.u32 920167782, %v1914
  %v1927 = vor.u32 %v1925, %v1926
  %v1928 = vshll.u32 920167782, %v1913
  %v1929 = vshrl.u32 1326507024, %v1914
  %v1930 = vor.u32 %v1928, %v1929
  %vm1931 = vcmp.lt.s32.totalorder %v1912, 1
  %vm1932 = vcmp.lt.s32.totalorder %v1912, 2
  %vm1933 = vcmp.lt.s32.totalorder %v1912, 3
  %vm1934 = vcmp.lt.s32.totalorder %v1912, 4
  %v1935 = vsel %vm1931, %v1915, %v1918
  %v1936 = vsel %vm1934, %v1924, 2102212464
  %v1937 = vsel %vm1933, %v1921, %v1936
  %v1938 = vsel %vm1932, %v1935, %v1937
  %v1939 = vsel %vm1931, %v1918, %v1921
  %v1940 = vsel %vm1934, %v1927, 920167782
  %v1941 = vsel %vm1933, %v1924, %v1940
  %v1942 = vsel %vm1932, %v1939, %v1941
  %v1943 = vsel %vm1931, %v1921, %v1924
  %v1944 = vsel %vm1934, %v1930, 1326507024
  %v1945 = vsel %vm1933, %v1927, %v1944
  %v1946 = vsel %vm1932, %v1943, %v1945
  %v1947 = vshll.u32 %v1907, 8
  %v1948 = vmul.u32.u64.compose %v1947, %v1946
  %v1949 = vextract.low.u32 %v1948
  %v1950 = vextract.high.u32 %v1948
  %v1951 = vmul.u32.u64.compose %v1947, %v1942
  %v1952 = vextract.low.u32 %v1951
  %v1953 = vextract.high.u32 %v1951
  %v1954 = vmul.u32 %v1947, %v1938
  %v1955 = vadd.s32 %v1950, %v1952
  %vm1956 = vc.u32 %v1950, %v1952
  %v1957 = vadd.s32 %v1953, 1
  %v1958 = vsel %vm1956, %v1957, %v1953
  %v1959 = vadd.s32 %v1954, %v1958
  %v1960 = vadd.s32 %v1959, 536870912
  %v1961 = vshrl.u32 %v1960, 30
  %v1962 = vshll.u32 %v1961, 30
  %v1963 = vsub.s32 %v1959, %v1962
  %vm1964 = vcmp.lt.s32.totalorder %v1963, 0
  %v1965 = vsub.s32 0, %v1963
  %v1966 = vsel %vm1964, %v1965, %v1963
  %v1967 = vclz %v1966
  %v1968 = vsub.s32 %v1967, 2
  %vm1969 = vcmp.gt.s32.totalorder 0, %v1968
  %v1970 = vsel %vm1969, 0, %v1968
  %v1971 = vsub.s32 32, %v1970
  %v1972 = vshll.u32 %v1963, %v1970
  %v1973 = vshrl.u32 %v1955, %v1971
  %v1974 = vor.u32 %v1972, %v1973
  %v1975 = vsub.s32 4294967266, %v1970
  %v1976 = vadd.s32 %v1975, 127
  %v1977 = vshll.u32 %v1976, 23
  %v1978 = vor.u32 4788187, %v1977
  %v1979 = vand.u32 2147483647, %v1978
  %v1981 = vcvt.s32.f32 %v1974
  %v1982 = vmul.f32 %v1981, %v1979
  %v1983 = vxor.u32 %v1982, 2147483648
  %v1984 = vsel %vm1901, %v1983, %v1982
  %v1985 = vsub.s32 4, %v1961
  %v1986 = vsel %vm1901, %v1985, %v1961
  %v1987 = vsel %vm1900, %v1673, %v1984
  %v1988 = vsel %vm1900, 0, %v1986
  %v1989 = vcosq.f32.pop %v1987
  %v1990 = vsinq.f32.pop %v1987
  %vm1991 = vweird.f32 %v1673
  %v1992 = vadd.s32 %v1988, 3
  %v1993 = vand.u32 %v1992, 3
  %vm1994 = vcmp.lt.s32.totalorder %v1993, 2
  %vm1995 = vcmp.eq.s32.totalorder %v1993, 0
  %v1996 = vxor.u32 %v1990, 2147483648
  %v1997 = vsel %vm1995, %v1989, %v1996
  %vm1998 = vcmp.eq.s32.totalorder %v1993, 2
  %v1999 = vxor.u32 %v1989, 2147483648
  %v2000 = vsel %vm1998, %v1999, %v1990
  %v2001 = vsel %vm1994, %v1997, %v2000
  %v2002 = vsel %vm1991, nan, %v2001
  %v2003 = vand.u32 2147483647, %v1590
  %vm2004 = vcmp.le.f32.partialorder %v2003, 0.7853982
  %vm2005 = vcmp.lt.s32.totalorder %v1590, 0
  %v2006 = vand.u32 %v1590, 2139095040
  %v2007 = vshrl.u32 %v2006, 23
  %v2008 = vsub.s32 %v2007, 127
  %v2009 = vand.u32 2147483647, %v1590
  %v2010 = vand.u32 %v2009, 8388607
  %v2011 = vor.u32 %v2010, 8388608
  %v2012 = vsub.s32 0, %v2011
  %v2013 = vadd.s32 %v2008, 1
  %vm2014 = vcmp.gt.s32.totalorder %v2013, 0
  %v2015 = vsel %vm2014, %v2013, 0
  %v2016 = vshrl.u32 %v2015, 5
  %v2017 = vand.u32 %v2015, 31
  %v2018 = vsub.s32 32, %v2017
  %v2019 = vshrl.u32 683565275, %v2018
  %v2020 = vshll.u32 683565275, %v2017
  %v2021 = vshrl.u32 2475754826, %v2018
  %v2022 = vor.u32 %v2020, %v2021
  %v2023 = vshll.u32 2475754826, %v2017
  %v2024 = vshrl.u32 2131351028, %v2018
  %v2025 = vor.u32 %v2023, %v2024
  %v2026 = vshll.u32 2131351028, %v2017
  %v2027 = vshrl.u32 2102212464, %v2018
  %v2028 = vor.u32 %v2026, %v2027
  %v2029 = vshll.u32 2102212464, %v2017
  %v2030 = vshrl.u32 920167782, %v2018
  %v2031 = vor.u32 %v2029, %v2030
  %v2032 = vshll.u32 920167782, %v2017
  %v2033 = vshrl.u32 1326507024, %v2018
  %v2034 = vor.u32 %v2032, %v2033
  %vm2035 = vcmp.lt.s32.totalorder %v2016, 1
  %vm2036 = vcmp.lt.s32.totalorder %v2016, 2
  %vm2037 = vcmp.lt.s32.totalorder %v2016, 3
  %vm2038 = vcmp.lt.s32.totalorder %v2016, 4
  %v2039 = vsel %vm2035, %v2019, %v2022
  %v2040 = vsel %vm2038, %v2028, 2102212464
  %v2041 = vsel %vm2037, %v2025, %v2040
  %v2042 = vsel %vm2036, %v2039, %v2041
  %v2043 = vsel %vm2035, %v2022, %v2025
  %v2044 = vsel %vm2038, %v2031, 920167782
  %v2045 = vsel %vm2037, %v2028, %v2044
  %v2046 = vsel %vm2036, %v2043, %v2045
  %v2047 = vsel %vm2035, %v2025, %v2028
  %v2048 = vsel %vm2038, %v2034, 1326507024
  %v2049 = vsel %vm2037, %v2031, %v2048
  %v2050 = vsel %vm2036, %v2047, %v2049
  %v2051 = vshll.u32 %v2011, 8
  %v2052 = vmul.u32.u64.compose %v2051, %v2050
  %v2053 = vextract.low.u32 %v2052
  %v2054 = vextract.high.u32 %v2052
  %v2055 = vmul.u32.u64.compose %v2051, %v2046
  %v2056 = vextract.low.u32 %v2055
  %v2057 = vextract.high.u32 %v2055
  %v2058 = vmul.u32 %v2051, %v2042
  %v2059 = vadd.s32 %v2054, %v2056
  %vm2060 = vc.u32 %v2054, %v2056
  %v2061 = vadd.s32 %v2057, 1
  %v2062 = vsel %vm2060, %v2061, %v2057
  %v2063 = vadd.s32 %v2058, %v2062
  %v2064 = vadd.s32 %v2063, 536870912
  %v2065 = vshrl.u32 %v2064, 30
  %v2066 = vshll.u32 %v2065, 30
  %v2067 = vsub.s32 %v2063, %v2066
  %vm2068 = vcmp.lt.s32.totalorder %v2067, 0
  %v2069 = vsub.s32 0, %v2067
  %v2070 = vsel %vm2068, %v2069, %v2067
  %v2071 = vclz %v2070
  %v2072 = vsub.s32 %v2071, 2
  %vm2073 = vcmp.gt.s32.totalorder 0, %v2072
  %v2074 = vsel %vm2073, 0, %v2072
  %v2075 = vsub.s32 32, %v2074
  %v2076 = vshll.u32 %v2067, %v2074
  %v2077 = vshrl.u32 %v2059, %v2075
  %v2078 = vor.u32 %v2076, %v2077
  %v2079 = vsub.s32 4294967266, %v2074
  %v2080 = vadd.s32 %v2079, 127
  %v2081 = vshll.u32 %v2080, 23
  %v2082 = vor.u32 4788187, %v2081
  %v2083 = vand.u32 2147483647, %v2082
  %v2085 = vcvt.s32.f32 %v2078
  %v2086 = vmul.f32 %v2085, %v2083
  %v2087 = vxor.u32 %v2086, 2147483648
  %v2088 = vsel %vm2005, %v2087, %v2086
  %v2089 = vsub.s32 4, %v2065
  %v2090 = vsel %vm2005, %v2089, %v2065
  %v2091 = vsel %vm2004, %v1590, %v2088
  %v2092 = vsel %vm2004, 0, %v2090
  %v2093 = vcosq.f32.pop %v2091
  %v2094 = vsinq.f32.pop %v2091
  %vm2095 = vweird.f32 %v1590
  %v2096 = vadd.s32 %v2092, 3
  %v2097 = vand.u32 %v2096, 3
  %vm2098 = vcmp.lt.s32.totalorder %v2097, 2
  %vm2099 = vcmp.eq.s32.totalorder %v2097, 0
  %v2100 = vxor.u32 %v2094, 2147483648
  %v2101 = vsel %vm2099, %v2093, %v2100
  %vm2102 = vcmp.eq.s32.totalorder %v2097, 2
  %v2103 = vxor.u32 %v2093, 2147483648
  %v2104 = vsel %vm2102, %v2103, %v2094
  %v2105 = vsel %vm2098, %v2101, %v2104
  %v2106 = vsel %vm2095, nan, %v2105
  %v2107 = vand.u32 2147483647, %v1592
  %vm2108 = vcmp.le.f32.partialorder %v2107, 0.7853982
  %vm2109 = vcmp.lt.s32.totalorder %v1592, 0
  %v2110 = vand.u32 %v1592, 2139095040
  %v2111 = vshrl.u32 %v2110, 23
  %v2112 = vsub.s32 %v2111, 127
  %v2113 = vand.u32 2147483647, %v1592
  %v2114 = vand.u32 %v2113, 8388607
  %v2115 = vor.u32 %v2114, 8388608
  %v2116 = vsub.s32 0, %v2115
  %v2117 = vadd.s32 %v2112, 1
  %vm2118 = vcmp.gt.s32.totalorder %v2117, 0
  %v2119 = vsel %vm2118, %v2117, 0
  %v2120 = vshrl.u32 %v2119, 5
  %v2121 = vand.u32 %v2119, 31
  %v2122 = vsub.s32 32, %v2121
  %v2123 = vshrl.u32 683565275, %v2122
  %v2124 = vshll.u32 683565275, %v2121
  %v2125 = vshrl.u32 2475754826, %v2122
  %v2126 = vor.u32 %v2124, %v2125
  %v2127 = vshll.u32 2475754826, %v2121
  %v2128 = vshrl.u32 2131351028, %v2122
  %v2129 = vor.u32 %v2127, %v2128
  %v2130 = vshll.u32 2131351028, %v2121
  %v2131 = vshrl.u32 2102212464, %v2122
  %v2132 = vor.u32 %v2130, %v2131
  %v2133 = vshll.u32 2102212464, %v2121
  %v2134 = vshrl.u32 920167782, %v2122
  %v2135 = vor.u32 %v2133, %v2134
  %v2136 = vshll.u32 920167782, %v2121
  %v2137 = vshrl.u32 1326507024, %v2122
  %v2138 = vor.u32 %v2136, %v2137
  %vm2139 = vcmp.lt.s32.totalorder %v2120, 1
  %vm2140 = vcmp.lt.s32.totalorder %v2120, 2
  %vm2141 = vcmp.lt.s32.totalorder %v2120, 3
  %vm2142 = vcmp.lt.s32.totalorder %v2120, 4
  %v2143 = vsel %vm2139, %v2123, %v2126
  %v2144 = vsel %vm2142, %v2132, 2102212464
  %v2145 = vsel %vm2141, %v2129, %v2144
  %v2146 = vsel %vm2140, %v2143, %v2145
  %v2147 = vsel %vm2139, %v2126, %v2129
  %v2148 = vsel %vm2142, %v2135, 920167782
  %v2149 = vsel %vm2141, %v2132, %v2148
  %v2150 = vsel %vm2140, %v2147, %v2149
  %v2151 = vsel %vm2139, %v2129, %v2132
  %v2152 = vsel %vm2142, %v2138, 1326507024
  %v2153 = vsel %vm2141, %v2135, %v2152
  %v2154 = vsel %vm2140, %v2151, %v2153
  %v2155 = vshll.u32 %v2115, 8
  %v2156 = vmul.u32.u64.compose %v2155, %v2154
  %v2157 = vextract.low.u32 %v2156
  %v2158 = vextract.high.u32 %v2156
  %v2159 = vmul.u32.u64.compose %v2155, %v2150
  %v2160 = vextract.low.u32 %v2159
  %v2161 = vextract.high.u32 %v2159
  %v2162 = vmul.u32 %v2155, %v2146
  %v2163 = vadd.s32 %v2158, %v2160
  %vm2164 = vc.u32 %v2158, %v2160
  %v2165 = vadd.s32 %v2161, 1
  %v2166 = vsel %vm2164, %v2165, %v2161
  %v2167 = vadd.s32 %v2162, %v2166
  %v2168 = vadd.s32 %v2167, 536870912
  %v2169 = vshrl.u32 %v2168, 30
  %v2170 = vshll.u32 %v2169, 30
  %v2171 = vsub.s32 %v2167, %v2170
  %vm2172 = vcmp.lt.s32.totalorder %v2171, 0
  %v2173 = vsub.s32 0, %v2171
  %v2174 = vsel %vm2172, %v2173, %v2171
  %v2175 = vclz %v2174
  %v2176 = vsub.s32 %v2175, 2
  %vm2177 = vcmp.gt.s32.totalorder 0, %v2176
  %v2178 = vsel %vm2177, 0, %v2176
  %v2179 = vsub.s32 32, %v2178
  %v2180 = vshll.u32 %v2171, %v2178
  %v2181 = vshrl.u32 %v2163, %v2179
  %v2182 = vor.u32 %v2180, %v2181
  %v2183 = vsub.s32 4294967266, %v2178
  %v2184 = vadd.s32 %v2183, 127
  %v2185 = vshll.u32 %v2184, 23
  %v2186 = vor.u32 4788187, %v2185
  %v2187 = vand.u32 2147483647, %v2186
  %v2189 = vcvt.s32.f32 %v2182
  %v2190 = vmul.f32 %v2189, %v2187
  %v2191 = vxor.u32 %v2190, 2147483648
  %v2192 = vsel %vm2109, %v2191, %v2190
  %v2193 = vsub.s32 4, %v2169
  %v2194 = vsel %vm2109, %v2193, %v2169
  %v2195 = vsel %vm2108, %v1592, %v2192
  %v2196 = vsel %vm2108, 0, %v2194
  %v2197 = vcosq.f32.pop %v2195
  %v2198 = vsinq.f32.pop %v2195
  %vm2199 = vweird.f32 %v1592
  %v2200 = vadd.s32 %v2196, 3
  %v2201 = vand.u32 %v2200, 3
  %vm2202 = vcmp.lt.s32.totalorder %v2201, 2
  %vm2203 = vcmp.eq.s32.totalorder %v2201, 0
  %v2204 = vxor.u32 %v2198, 2147483648
  %v2205 = vsel %vm2203, %v2197, %v2204
  %vm2206 = vcmp.eq.s32.totalorder %v2201, 2
  %v2207 = vxor.u32 %v2197, 2147483648
  %v2208 = vsel %vm2206, %v2207, %v2198
  %v2209 = vsel %vm2202, %v2205, %v2208
  %v2210 = vsel %vm2199, nan, %v2209
  %v2211 = vand.u32 2147483647, %v1678
  %vm2212 = vcmp.le.f32.partialorder %v2211, 0.7853982
  %vm2213 = vcmp.lt.s32.totalorder %v1678, 0
  %v2214 = vand.u32 %v1678, 2139095040
  %v2215 = vshrl.u32 %v2214, 23
  %v2216 = vsub.s32 %v2215, 127
  %v2217 = vand.u32 2147483647, %v1678
  %v2218 = vand.u32 %v2217, 8388607
  %v2219 = vor.u32 %v2218, 8388608
  %v2220 = vsub.s32 0, %v2219
  %v2221 = vadd.s32 %v2216, 1
  %vm2222 = vcmp.gt.s32.totalorder %v2221, 0
  %v2223 = vsel %vm2222, %v2221, 0
  %v2224 = vshrl.u32 %v2223, 5
  %v2225 = vand.u32 %v2223, 31
  %v2226 = vsub.s32 32, %v2225
  %v2227 = vshrl.u32 683565275, %v2226
  %v2228 = vshll.u32 683565275, %v2225
  %v2229 = vshrl.u32 2475754826, %v2226
  %v2230 = vor.u32 %v2228, %v2229
  %v2231 = vshll.u32 2475754826, %v2225
  %v2232 = vshrl.u32 2131351028, %v2226
  %v2233 = vor.u32 %v2231, %v2232
  %v2234 = vshll.u32 2131351028, %v2225
  %v2235 = vshrl.u32 2102212464, %v2226
  %v2236 = vor.u32 %v2234, %v2235
  %v2237 = vshll.u32 2102212464, %v2225
  %v2238 = vshrl.u32 920167782, %v2226
  %v2239 = vor.u32 %v2237, %v2238
  %v2240 = vshll.u32 920167782, %v2225
  %v2241 = vshrl.u32 1326507024, %v2226
  %v2242 = vor.u32 %v2240, %v2241
  %vm2243 = vcmp.lt.s32.totalorder %v2224, 1
  %vm2244 = vcmp.lt.s32.totalorder %v2224, 2
  %vm2245 = vcmp.lt.s32.totalorder %v2224, 3
  %vm2246 = vcmp.lt.s32.totalorder %v2224, 4
  %v2247 = vsel %vm2243, %v2227, %v2230
  %v2248 = vsel %vm2246, %v2236, 2102212464
  %v2249 = vsel %vm2245, %v2233, %v2248
  %v2250 = vsel %vm2244, %v2247, %v2249
  %v2251 = vsel %vm2243, %v2230, %v2233
  %v2252 = vsel %vm2246, %v2239, 920167782
  %v2253 = vsel %vm2245, %v2236, %v2252
  %v2254 = vsel %vm2244, %v2251, %v2253
  %v2255 = vsel %vm2243, %v2233, %v2236
  %v2256 = vsel %vm2246, %v2242, 1326507024
  %v2257 = vsel %vm2245, %v2239, %v2256
  %v2258 = vsel %vm2244, %v2255, %v2257
  %v2259 = vshll.u32 %v2219, 8
  %v2260 = vmul.u32.u64.compose %v2259, %v2258
  %v2261 = vextract.low.u32 %v2260
  %v2262 = vextract.high.u32 %v2260
  %v2263 = vmul.u32.u64.compose %v2259, %v2254
  %v2264 = vextract.low.u32 %v2263
  %v2265 = vextract.high.u32 %v2263
  %v2266 = vmul.u32 %v2259, %v2250
  %v2267 = vadd.s32 %v2262, %v2264
  %vm2268 = vc.u32 %v2262, %v2264
  %v2269 = vadd.s32 %v2265, 1
  %v2270 = vsel %vm2268, %v2269, %v2265
  %v2271 = vadd.s32 %v2266, %v2270
  %v2272 = vadd.s32 %v2271, 536870912
  %v2273 = vshrl.u32 %v2272, 30
  %v2274 = vshll.u32 %v2273, 30
  %v2275 = vsub.s32 %v2271, %v2274
  %vm2276 = vcmp.lt.s32.totalorder %v2275, 0
  %v2277 = vsub.s32 0, %v2275
  %v2278 = vsel %vm2276, %v2277, %v2275
  %v2279 = vclz %v2278
  %v2280 = vsub.s32 %v2279, 2
  %vm2281 = vcmp.gt.s32.totalorder 0, %v2280
  %v2282 = vsel %vm2281, 0, %v2280
  %v2283 = vsub.s32 32, %v2282
  %v2284 = vshll.u32 %v2275, %v2282
  %v2285 = vshrl.u32 %v2267, %v2283
  %v2286 = vor.u32 %v2284, %v2285
  %v2287 = vsub.s32 4294967266, %v2282
  %v2288 = vadd.s32 %v2287, 127
  %v2289 = vshll.u32 %v2288, 23
  %v2290 = vor.u32 4788187, %v2289
  %v2291 = vand.u32 2147483647, %v2290
  %v2293 = vcvt.s32.f32 %v2286
  %v2294 = vmul.f32 %v2293, %v2291
  %v2295 = vxor.u32 %v2294, 2147483648
  %v2296 = vsel %vm2213, %v2295, %v2294
  %v2297 = vsub.s32 4, %v2273
  %v2298 = vsel %vm2213, %v2297, %v2273
  %v2299 = vsel %vm2212, %v1678, %v2296
  %v2300 = vsel %vm2212, 0, %v2298
  %v2301 = vcosq.f32.pop %v2299
  %v2302 = vsinq.f32.pop %v2299
  %vm2303 = vweird.f32 %v1678
  %v2304 = vadd.s32 %v2300, 3
  %v2305 = vand.u32 %v2304, 3
  %vm2306 = vcmp.lt.s32.totalorder %v2305, 2
  %vm2307 = vcmp.eq.s32.totalorder %v2305, 0
  %v2308 = vxor.u32 %v2302, 2147483648
  %v2309 = vsel %vm2307, %v2301, %v2308
  %vm2310 = vcmp.eq.s32.totalorder %v2305, 2
  %v2311 = vxor.u32 %v2301, 2147483648
  %v2312 = vsel %vm2310, %v2311, %v2302
  %v2313 = vsel %vm2306, %v2309, %v2312
  %v2314 = vsel %vm2303, nan, %v2313
  %v2315 = vand.u32 2147483647, %v1596
  %vm2316 = vcmp.le.f32.partialorder %v2315, 0.7853982
  %vm2317 = vcmp.lt.s32.totalorder %v1596, 0
  %v2318 = vand.u32 %v1596, 2139095040
  %v2319 = vshrl.u32 %v2318, 23
  %v2320 = vsub.s32 %v2319, 127
  %v2321 = vand.u32 2147483647, %v1596
  %v2322 = vand.u32 %v2321, 8388607
  %v2323 = vor.u32 %v2322, 8388608
  %v2324 = vsub.s32 0, %v2323
  %v2325 = vadd.s32 %v2320, 1
  %vm2326 = vcmp.gt.s32.totalorder %v2325, 0
  %v2327 = vsel %vm2326, %v2325, 0
  %v2328 = vshrl.u32 %v2327, 5
  %v2329 = vand.u32 %v2327, 31
  %v2330 = vsub.s32 32, %v2329
  %v2331 = vshrl.u32 683565275, %v2330
  %v2332 = vshll.u32 683565275, %v2329
  %v2333 = vshrl.u32 2475754826, %v2330
  %v2334 = vor.u32 %v2332, %v2333
  %v2335 = vshll.u32 2475754826, %v2329
  %v2336 = vshrl.u32 2131351028, %v2330
  %v2337 = vor.u32 %v2335, %v2336
  %v2338 = vshll.u32 2131351028, %v2329
  %v2339 = vshrl.u32 2102212464, %v2330
  %v2340 = vor.u32 %v2338, %v2339
  %v2341 = vshll.u32 2102212464, %v2329
  %v2342 = vshrl.u32 920167782, %v2330
  %v2343 = vor.u32 %v2341, %v2342
  %v2344 = vshll.u32 920167782, %v2329
  %v2345 = vshrl.u32 1326507024, %v2330
  %v2346 = vor.u32 %v2344, %v2345
  %vm2347 = vcmp.lt.s32.totalorder %v2328, 1
  %vm2348 = vcmp.lt.s32.totalorder %v2328, 2
  %vm2349 = vcmp.lt.s32.totalorder %v2328, 3
  %vm2350 = vcmp.lt.s32.totalorder %v2328, 4
  %v2351 = vsel %vm2347, %v2331, %v2334
  %v2352 = vsel %vm2350, %v2340, 2102212464
  %v2353 = vsel %vm2349, %v2337, %v2352
  %v2354 = vsel %vm2348, %v2351, %v2353
  %v2355 = vsel %vm2347, %v2334, %v2337
  %v2356 = vsel %vm2350, %v2343, 920167782
  %v2357 = vsel %vm2349, %v2340, %v2356
  %v2358 = vsel %vm2348, %v2355, %v2357
  %v2359 = vsel %vm2347, %v2337, %v2340
  %v2360 = vsel %vm2350, %v2346, 1326507024
  %v2361 = vsel %vm2349, %v2343, %v2360
  %v2362 = vsel %vm2348, %v2359, %v2361
  %v2363 = vshll.u32 %v2323, 8
  %v2364 = vmul.u32.u64.compose %v2363, %v2362
  %v2365 = vextract.low.u32 %v2364
  %v2366 = vextract.high.u32 %v2364
  %v2367 = vmul.u32.u64.compose %v2363, %v2358
  %v2368 = vextract.low.u32 %v2367
  %v2369 = vextract.high.u32 %v2367
  %v2370 = vmul.u32 %v2363, %v2354
  %v2371 = vadd.s32 %v2366, %v2368
  %vm2372 = vc.u32 %v2366, %v2368
  %v2373 = vadd.s32 %v2369, 1
  %v2374 = vsel %vm2372, %v2373, %v2369
  %v2375 = vadd.s32 %v2370, %v2374
  %v2376 = vadd.s32 %v2375, 536870912
  %v2377 = vshrl.u32 %v2376, 30
  %v2378 = vshll.u32 %v2377, 30
  %v2379 = vsub.s32 %v2375, %v2378
  %vm2380 = vcmp.lt.s32.totalorder %v2379, 0
  %v2381 = vsub.s32 0, %v2379
  %v2382 = vsel %vm2380, %v2381, %v2379
  %v2383 = vclz %v2382
  %v2384 = vsub.s32 %v2383, 2
  %vm2385 = vcmp.gt.s32.totalorder 0, %v2384
  %v2386 = vsel %vm2385, 0, %v2384
  %v2387 = vsub.s32 32, %v2386
  %v2388 = vshll.u32 %v2379, %v2386
  %v2389 = vshrl.u32 %v2371, %v2387
  %v2390 = vor.u32 %v2388, %v2389
  %v2391 = vsub.s32 4294967266, %v2386
  %v2392 = vadd.s32 %v2391, 127
  %v2393 = vshll.u32 %v2392, 23
  %v2394 = vor.u32 4788187, %v2393
  %v2395 = vand.u32 2147483647, %v2394
  %v2397 = vcvt.s32.f32 %v2390
  %v2398 = vmul.f32 %v2397, %v2395
  %v2399 = vxor.u32 %v2398, 2147483648
  %v2400 = vsel %vm2317, %v2399, %v2398
  %v2401 = vsub.s32 4, %v2377
  %v2402 = vsel %vm2317, %v2401, %v2377
  %v2403 = vsel %vm2316, %v1596, %v2400
  %v2404 = vsel %vm2316, 0, %v2402
  %v2405 = vcosq.f32.pop %v2403
  %v2406 = vsinq.f32.pop %v2403
  %vm2407 = vweird.f32 %v1596
  %v2408 = vadd.s32 %v2404, 3
  %v2409 = vand.u32 %v2408, 3
  %vm2410 = vcmp.lt.s32.totalorder %v2409, 2
  %vm2411 = vcmp.eq.s32.totalorder %v2409, 0
  %v2412 = vxor.u32 %v2406, 2147483648
  %v2413 = vsel %vm2411, %v2405, %v2412
  %vm2414 = vcmp.eq.s32.totalorder %v2409, 2
  %v2415 = vxor.u32 %v2405, 2147483648
  %v2416 = vsel %vm2414, %v2415, %v2406
  %v2417 = vsel %vm2410, %v2413, %v2416
  %v2418 = vsel %vm2407, nan, %v2417
  %v2419 = vand.u32 2147483647, %v1598
  %vm2420 = vcmp.le.f32.partialorder %v2419, 0.7853982
  %vm2421 = vcmp.lt.s32.totalorder %v1598, 0
  %v2422 = vand.u32 %v1598, 2139095040
  %v2423 = vshrl.u32 %v2422, 23
  %v2424 = vsub.s32 %v2423, 127
  %v2425 = vand.u32 2147483647, %v1598
  %v2426 = vand.u32 %v2425, 8388607
  %v2427 = vor.u32 %v2426, 8388608
  %v2428 = vsub.s32 0, %v2427
  %v2429 = vadd.s32 %v2424, 1
  %vm2430 = vcmp.gt.s32.totalorder %v2429, 0
  %v2431 = vsel %vm2430, %v2429, 0
  %v2432 = vshrl.u32 %v2431, 5
  %v2433 = vand.u32 %v2431, 31
  %v2434 = vsub.s32 32, %v2433
  %v2435 = vshrl.u32 683565275, %v2434
  %v2436 = vshll.u32 683565275, %v2433
  %v2437 = vshrl.u32 2475754826, %v2434
  %v2438 = vor.u32 %v2436, %v2437
  %v2439 = vshll.u32 2475754826, %v2433
  %v2440 = vshrl.u32 2131351028, %v2434
  %v2441 = vor.u32 %v2439, %v2440
  %v2442 = vshll.u32 2131351028, %v2433
  %v2443 = vshrl.u32 2102212464, %v2434
  %v2444 = vor.u32 %v2442, %v2443
  %v2445 = vshll.u32 2102212464, %v2433
  %v2446 = vshrl.u32 920167782, %v2434
  %v2447 = vor.u32 %v2445, %v2446
  %v2448 = vshll.u32 920167782, %v2433
  %v2449 = vshrl.u32 1326507024, %v2434
  %v2450 = vor.u32 %v2448, %v2449
  %vm2451 = vcmp.lt.s32.totalorder %v2432, 1
  %vm2452 = vcmp.lt.s32.totalorder %v2432, 2
  %vm2453 = vcmp.lt.s32.totalorder %v2432, 3
  %vm2454 = vcmp.lt.s32.totalorder %v2432, 4
  %v2455 = vsel %vm2451, %v2435, %v2438
  %v2456 = vsel %vm2454, %v2444, 2102212464
  %v2457 = vsel %vm2453, %v2441, %v2456
  %v2458 = vsel %vm2452, %v2455, %v2457
  %v2459 = vsel %vm2451, %v2438, %v2441
  %v2460 = vsel %vm2454, %v2447, 920167782
  %v2461 = vsel %vm2453, %v2444, %v2460
  %v2462 = vsel %vm2452, %v2459, %v2461
  %v2463 = vsel %vm2451, %v2441, %v2444
  %v2464 = vsel %vm2454, %v2450, 1326507024
  %v2465 = vsel %vm2453, %v2447, %v2464
  %v2466 = vsel %vm2452, %v2463, %v2465
  %v2467 = vshll.u32 %v2427, 8
  %v2468 = vmul.u32.u64.compose %v2467, %v2466
  %v2469 = vextract.low.u32 %v2468
  %v2470 = vextract.high.u32 %v2468
  %v2471 = vmul.u32.u64.compose %v2467, %v2462
  %v2472 = vextract.low.u32 %v2471
  %v2473 = vextract.high.u32 %v2471
  %v2474 = vmul.u32 %v2467, %v2458
  %v2475 = vadd.s32 %v2470, %v2472
  %vm2476 = vc.u32 %v2470, %v2472
  %v2477 = vadd.s32 %v2473, 1
  %v2478 = vsel %vm2476, %v2477, %v2473
  %v2479 = vadd.s32 %v2474, %v2478
  %v2480 = vadd.s32 %v2479, 536870912
  %v2481 = vshrl.u32 %v2480, 30
  %v2482 = vshll.u32 %v2481, 30
  %v2483 = vsub.s32 %v2479, %v2482
  %vm2484 = vcmp.lt.s32.totalorder %v2483, 0
  %v2485 = vsub.s32 0, %v2483
  %v2486 = vsel %vm2484, %v2485, %v2483
  %v2487 = vclz %v2486
  %v2488 = vsub.s32 %v2487, 2
  %vm2489 = vcmp.gt.s32.totalorder 0, %v2488
  %v2490 = vsel %vm2489, 0, %v2488
  %v2491 = vsub.s32 32, %v2490
  %v2492 = vshll.u32 %v2483, %v2490
  %v2493 = vshrl.u32 %v2475, %v2491
  %v2494 = vor.u32 %v2492, %v2493
  %v2495 = vsub.s32 4294967266, %v2490
  %v2496 = vadd.s32 %v2495, 127
  %v2497 = vshll.u32 %v2496, 23
  %v2498 = vor.u32 4788187, %v2497
  %v2499 = vand.u32 2147483647, %v2498
  %v2501 = vcvt.s32.f32 %v2494
  %v2502 = vmul.f32 %v2501, %v2499
  %v2503 = vxor.u32 %v2502, 2147483648
  %v2504 = vsel %vm2421, %v2503, %v2502
  %v2505 = vsub.s32 4, %v2481
  %v2506 = vsel %vm2421, %v2505, %v2481
  %v2507 = vsel %vm2420, %v1598, %v2504
  %v2508 = vsel %vm2420, 0, %v2506
  %v2509 = vcosq.f32.pop %v2507
  %v2510 = vsinq.f32.pop %v2507
  %vm2511 = vweird.f32 %v1598
  %v2512 = vadd.s32 %v2508, 3
  %v2513 = vand.u32 %v2512, 3
  %vm2514 = vcmp.lt.s32.totalorder %v2513, 2
  %vm2515 = vcmp.eq.s32.totalorder %v2513, 0
  %v2516 = vxor.u32 %v2510, 2147483648
  %v2517 = vsel %vm2515, %v2509, %v2516
  %vm2518 = vcmp.eq.s32.totalorder %v2513, 2
  %v2519 = vxor.u32 %v2509, 2147483648
  %v2520 = vsel %vm2518, %v2519, %v2510
  %v2521 = vsel %vm2514, %v2517, %v2520
  %v2522 = vsel %vm2511, nan, %v2521
  %v2523 = vand.u32 2147483647, %v1683
  %vm2524 = vcmp.le.f32.partialorder %v2523, 0.7853982
  %vm2525 = vcmp.lt.s32.totalorder %v1683, 0
  %v2526 = vand.u32 %v1683, 2139095040
  %v2527 = vshrl.u32 %v2526, 23
  %v2528 = vsub.s32 %v2527, 127
  %v2529 = vand.u32 2147483647, %v1683
  %v2530 = vand.u32 %v2529, 8388607
  %v2531 = vor.u32 %v2530, 8388608
  %v2532 = vsub.s32 0, %v2531
  %v2533 = vadd.s32 %v2528, 1
  %vm2534 = vcmp.gt.s32.totalorder %v2533, 0
  %v2535 = vsel %vm2534, %v2533, 0
  %v2536 = vshrl.u32 %v2535, 5
  %v2537 = vand.u32 %v2535, 31
  %v2538 = vsub.s32 32, %v2537
  %v2539 = vshrl.u32 683565275, %v2538
  %v2540 = vshll.u32 683565275, %v2537
  %v2541 = vshrl.u32 2475754826, %v2538
  %v2542 = vor.u32 %v2540, %v2541
  %v2543 = vshll.u32 2475754826, %v2537
  %v2544 = vshrl.u32 2131351028, %v2538
  %v2545 = vor.u32 %v2543, %v2544
  %v2546 = vshll.u32 2131351028, %v2537
  %v2547 = vshrl.u32 2102212464, %v2538
  %v2548 = vor.u32 %v2546, %v2547
  %v2549 = vshll.u32 2102212464, %v2537
  %v2550 = vshrl.u32 920167782, %v2538
  %v2551 = vor.u32 %v2549, %v2550
  %v2552 = vshll.u32 920167782, %v2537
  %v2553 = vshrl.u32 1326507024, %v2538
  %v2554 = vor.u32 %v2552, %v2553
  %vm2555 = vcmp.lt.s32.totalorder %v2536, 1
  %vm2556 = vcmp.lt.s32.totalorder %v2536, 2
  %vm2557 = vcmp.lt.s32.totalorder %v2536, 3
  %vm2558 = vcmp.lt.s32.totalorder %v2536, 4
  %v2559 = vsel %vm2555, %v2539, %v2542
  %v2560 = vsel %vm2558, %v2548, 2102212464
  %v2561 = vsel %vm2557, %v2545, %v2560
  %v2562 = vsel %vm2556, %v2559, %v2561
  %v2563 = vsel %vm2555, %v2542, %v2545
  %v2564 = vsel %vm2558, %v2551, 920167782
  %v2565 = vsel %vm2557, %v2548, %v2564
  %v2566 = vsel %vm2556, %v2563, %v2565
  %v2567 = vsel %vm2555, %v2545, %v2548
  %v2568 = vsel %vm2558, %v2554, 1326507024
  %v2569 = vsel %vm2557, %v2551, %v2568
  %v2570 = vsel %vm2556, %v2567, %v2569
  %v2571 = vshll.u32 %v2531, 8
  %v2572 = vmul.u32.u64.compose %v2571, %v2570
  %v2573 = vextract.low.u32 %v2572
  %v2574 = vextract.high.u32 %v2572
  %v2575 = vmul.u32.u64.compose %v2571, %v2566
  %v2576 = vextract.low.u32 %v2575
  %v2577 = vextract.high.u32 %v2575
  %v2578 = vmul.u32 %v2571, %v2562
  %v2579 = vadd.s32 %v2574, %v2576
  %vm2580 = vc.u32 %v2574, %v2576
  %v2581 = vadd.s32 %v2577, 1
  %v2582 = vsel %vm2580, %v2581, %v2577
  %v2583 = vadd.s32 %v2578, %v2582
  %v2584 = vadd.s32 %v2583, 536870912
  %v2585 = vshrl.u32 %v2584, 30
  %v2586 = vshll.u32 %v2585, 30
  %v2587 = vsub.s32 %v2583, %v2586
  %vm2588 = vcmp.lt.s32.totalorder %v2587, 0
  %v2589 = vsub.s32 0, %v2587
  %v2590 = vsel %vm2588, %v2589, %v2587
  %v2591 = vclz %v2590
  %v2592 = vsub.s32 %v2591, 2
  %vm2593 = vcmp.gt.s32.totalorder 0, %v2592
  %v2594 = vsel %vm2593, 0, %v2592
  %v2595 = vsub.s32 32, %v2594
  %v2596 = vshll.u32 %v2587, %v2594
  %v2597 = vshrl.u32 %v2579, %v2595
  %v2598 = vor.u32 %v2596, %v2597
  %v2599 = vsub.s32 4294967266, %v2594
  %v2600 = vadd.s32 %v2599, 127
  %v2601 = vshll.u32 %v2600, 23
  %v2602 = vor.u32 4788187, %v2601
  %v2603 = vand.u32 2147483647, %v2602
  %v2605 = vcvt.s32.f32 %v2598
  %v2606 = vmul.f32 %v2605, %v2603
  %v2607 = vxor.u32 %v2606, 2147483648
  %v2608 = vsel %vm2525, %v2607, %v2606
  %v2609 = vsub.s32 4, %v2585
  %v2610 = vsel %vm2525, %v2609, %v2585
  %v2611 = vsel %vm2524, %v1683, %v2608
  %v2612 = vsel %vm2524, 0, %v2610
  %v2613 = vcosq.f32.pop %v2611
  %v2614 = vsinq.f32.pop %v2611
  %vm2615 = vweird.f32 %v1683
  %v2616 = vadd.s32 %v2612, 3
  %v2617 = vand.u32 %v2616, 3
  %vm2618 = vcmp.lt.s32.totalorder %v2617, 2
  %vm2619 = vcmp.eq.s32.totalorder %v2617, 0
  %v2620 = vxor.u32 %v2614, 2147483648
  %v2621 = vsel %vm2619, %v2613, %v2620
  %vm2622 = vcmp.eq.s32.totalorder %v2617, 2
  %v2623 = vxor.u32 %v2613, 2147483648
  %v2624 = vsel %vm2622, %v2623, %v2614
  %v2625 = vsel %vm2618, %v2621, %v2624
  %v2626 = vsel %vm2615, nan, %v2625
  %v2627 = vand.u32 2147483647, %v1602
  %vm2628 = vcmp.le.f32.partialorder %v2627, 0.7853982
  %vm2629 = vcmp.lt.s32.totalorder %v1602, 0
  %v2630 = vand.u32 %v1602, 2139095040
  %v2631 = vshrl.u32 %v2630, 23
  %v2632 = vsub.s32 %v2631, 127
  %v2633 = vand.u32 2147483647, %v1602
  %v2634 = vand.u32 %v2633, 8388607
  %v2635 = vor.u32 %v2634, 8388608
  %v2636 = vsub.s32 0, %v2635
  %v2637 = vadd.s32 %v2632, 1
  %vm2638 = vcmp.gt.s32.totalorder %v2637, 0
  %v2639 = vsel %vm2638, %v2637, 0
  %v2640 = vshrl.u32 %v2639, 5
  %v2641 = vand.u32 %v2639, 31
  %v2642 = vsub.s32 32, %v2641
  %v2643 = vshrl.u32 683565275, %v2642
  %v2644 = vshll.u32 683565275, %v2641
  %v2645 = vshrl.u32 2475754826, %v2642
  %v2646 = vor.u32 %v2644, %v2645
  %v2647 = vshll.u32 2475754826, %v2641
  %v2648 = vshrl.u32 2131351028, %v2642
  %v2649 = vor.u32 %v2647, %v2648
  %v2650 = vshll.u32 2131351028, %v2641
  %v2651 = vshrl.u32 2102212464, %v2642
  %v2652 = vor.u32 %v2650, %v2651
  %v2653 = vshll.u32 2102212464, %v2641
  %v2654 = vshrl.u32 920167782, %v2642
  %v2655 = vor.u32 %v2653, %v2654
  %v2656 = vshll.u32 920167782, %v2641
  %v2657 = vshrl.u32 1326507024, %v2642
  %v2658 = vor.u32 %v2656, %v2657
  %vm2659 = vcmp.lt.s32.totalorder %v2640, 1
  %vm2660 = vcmp.lt.s32.totalorder %v2640, 2
  %vm2661 = vcmp.lt.s32.totalorder %v2640, 3
  %vm2662 = vcmp.lt.s32.totalorder %v2640, 4
  %v2663 = vsel %vm2659, %v2643, %v2646
  %v2664 = vsel %vm2662, %v2652, 2102212464
  %v2665 = vsel %vm2661, %v2649, %v2664
  %v2666 = vsel %vm2660, %v2663, %v2665
  %v2667 = vsel %vm2659, %v2646, %v2649
  %v2668 = vsel %vm2662, %v2655, 920167782
  %v2669 = vsel %vm2661, %v2652, %v2668
  %v2670 = vsel %vm2660, %v2667, %v2669
  %v2671 = vsel %vm2659, %v2649, %v2652
  %v2672 = vsel %vm2662, %v2658, 1326507024
  %v2673 = vsel %vm2661, %v2655, %v2672
  %v2674 = vsel %vm2660, %v2671, %v2673
  %v2675 = vshll.u32 %v2635, 8
  %v2676 = vmul.u32.u64.compose %v2675, %v2674
  %v2677 = vextract.low.u32 %v2676
  %v2678 = vextract.high.u32 %v2676
  %v2679 = vmul.u32.u64.compose %v2675, %v2670
  %v2680 = vextract.low.u32 %v2679
  %v2681 = vextract.high.u32 %v2679
  %v2682 = vmul.u32 %v2675, %v2666
  %v2683 = vadd.s32 %v2678, %v2680
  %vm2684 = vc.u32 %v2678, %v2680
  %v2685 = vadd.s32 %v2681, 1
  %v2686 = vsel %vm2684, %v2685, %v2681
  %v2687 = vadd.s32 %v2682, %v2686
  %v2688 = vadd.s32 %v2687, 536870912
  %v2689 = vshrl.u32 %v2688, 30
  %v2690 = vshll.u32 %v2689, 30
  %v2691 = vsub.s32 %v2687, %v2690
  %vm2692 = vcmp.lt.s32.totalorder %v2691, 0
  %v2693 = vsub.s32 0, %v2691
  %v2694 = vsel %vm2692, %v2693, %v2691
  %v2695 = vclz %v2694
  %v2696 = vsub.s32 %v2695, 2
  %vm2697 = vcmp.gt.s32.totalorder 0, %v2696
  %v2698 = vsel %vm2697, 0, %v2696
  %v2699 = vsub.s32 32, %v2698
  %v2700 = vshll.u32 %v2691, %v2698
  %v2701 = vshrl.u32 %v2683, %v2699
  %v2702 = vor.u32 %v2700, %v2701
  %v2703 = vsub.s32 4294967266, %v2698
  %v2704 = vadd.s32 %v2703, 127
  %v2705 = vshll.u32 %v2704, 23
  %v2706 = vor.u32 4788187, %v2705
  %v2707 = vand.u32 2147483647, %v2706
  %v2709 = vcvt.s32.f32 %v2702
  %v2710 = vmul.f32 %v2709, %v2707
  %v2711 = vxor.u32 %v2710, 2147483648
  %v2712 = vsel %vm2629, %v2711, %v2710
  %v2713 = vsub.s32 4, %v2689
  %v2714 = vsel %vm2629, %v2713, %v2689
  %v2715 = vsel %vm2628, %v1602, %v2712
  %v2716 = vsel %vm2628, 0, %v2714
  %v2717 = vcosq.f32.pop %v2715
  %v2718 = vsinq.f32.pop %v2715
  %vm2719 = vweird.f32 %v1602
  %v2720 = vadd.s32 %v2716, 3
  %v2721 = vand.u32 %v2720, 3
  %vm2722 = vcmp.lt.s32.totalorder %v2721, 2
  %vm2723 = vcmp.eq.s32.totalorder %v2721, 0
  %v2724 = vxor.u32 %v2718, 2147483648
  %v2725 = vsel %vm2723, %v2717, %v2724
  %vm2726 = vcmp.eq.s32.totalorder %v2721, 2
  %v2727 = vxor.u32 %v2717, 2147483648
  %v2728 = vsel %vm2726, %v2727, %v2718
  %v2729 = vsel %vm2722, %v2725, %v2728
  %v2730 = vsel %vm2719, nan, %v2729
  %v2731 = vand.u32 2147483647, %v1604
  %vm2732 = vcmp.le.f32.partialorder %v2731, 0.7853982
  %vm2733 = vcmp.lt.s32.totalorder %v1604, 0
  %v2734 = vand.u32 %v1604, 2139095040
  %v2735 = vshrl.u32 %v2734, 23
  %v2736 = vsub.s32 %v2735, 127
  %v2737 = vand.u32 2147483647, %v1604
  %v2738 = vand.u32 %v2737, 8388607
  %v2739 = vor.u32 %v2738, 8388608
  %v2740 = vsub.s32 0, %v2739
  %v2741 = vadd.s32 %v2736, 1
  %vm2742 = vcmp.gt.s32.totalorder %v2741, 0
  %v2743 = vsel %vm2742, %v2741, 0
  %v2744 = vshrl.u32 %v2743, 5
  %v2745 = vand.u32 %v2743, 31
  %v2746 = vsub.s32 32, %v2745
  %v2747 = vshrl.u32 683565275, %v2746
  %v2748 = vshll.u32 683565275, %v2745
  %v2749 = vshrl.u32 2475754826, %v2746
  %v2750 = vor.u32 %v2748, %v2749
  %v2751 = vshll.u32 2475754826, %v2745
  %v2752 = vshrl.u32 2131351028, %v2746
  %v2753 = vor.u32 %v2751, %v2752
  %v2754 = vshll.u32 2131351028, %v2745
  %v2755 = vshrl.u32 2102212464, %v2746
  %v2756 = vor.u32 %v2754, %v2755
  %v2757 = vshll.u32 2102212464, %v2745
  %v2758 = vshrl.u32 920167782, %v2746
  %v2759 = vor.u32 %v2757, %v2758
  %v2760 = vshll.u32 920167782, %v2745
  %v2761 = vshrl.u32 1326507024, %v2746
  %v2762 = vor.u32 %v2760, %v2761
  %vm2763 = vcmp.lt.s32.totalorder %v2744, 1
  %vm2764 = vcmp.lt.s32.totalorder %v2744, 2
  %vm2765 = vcmp.lt.s32.totalorder %v2744, 3
  %vm2766 = vcmp.lt.s32.totalorder %v2744, 4
  %v2767 = vsel %vm2763, %v2747, %v2750
  %v2768 = vsel %vm2766, %v2756, 2102212464
  %v2769 = vsel %vm2765, %v2753, %v2768
  %v2770 = vsel %vm2764, %v2767, %v2769
  %v2771 = vsel %vm2763, %v2750, %v2753
  %v2772 = vsel %vm2766, %v2759, 920167782
  %v2773 = vsel %vm2765, %v2756, %v2772
  %v2774 = vsel %vm2764, %v2771, %v2773
  %v2775 = vsel %vm2763, %v2753, %v2756
  %v2776 = vsel %vm2766, %v2762, 1326507024
  %v2777 = vsel %vm2765, %v2759, %v2776
  %v2778 = vsel %vm2764, %v2775, %v2777
  %v2779 = vshll.u32 %v2739, 8
  %v2780 = vmul.u32.u64.compose %v2779, %v2778
  %v2781 = vextract.low.u32 %v2780
  %v2782 = vextract.high.u32 %v2780
  %v2783 = vmul.u32.u64.compose %v2779, %v2774
  %v2784 = vextract.low.u32 %v2783
  %v2785 = vextract.high.u32 %v2783
  %v2786 = vmul.u32 %v2779, %v2770
  %v2787 = vadd.s32 %v2782, %v2784
  %vm2788 = vc.u32 %v2782, %v2784
  %v2789 = vadd.s32 %v2785, 1
  %v2790 = vsel %vm2788, %v2789, %v2785
  %v2791 = vadd.s32 %v2786, %v2790
  %v2792 = vadd.s32 %v2791, 536870912
  %v2793 = vshrl.u32 %v2792, 30
  %v2794 = vshll.u32 %v2793, 30
  %v2795 = vsub.s32 %v2791, %v2794
  %vm2796 = vcmp.lt.s32.totalorder %v2795, 0
  %v2797 = vsub.s32 0, %v2795
  %v2798 = vsel %vm2796, %v2797, %v2795
  %v2799 = vclz %v2798
  %v2800 = vsub.s32 %v2799, 2
  %vm2801 = vcmp.gt.s32.totalorder 0, %v2800
  %v2802 = vsel %vm2801, 0, %v2800
  %v2803 = vsub.s32 32, %v2802
  %v2804 = vshll.u32 %v2795, %v2802
  %v2805 = vshrl.u32 %v2787, %v2803
  %v2806 = vor.u32 %v2804, %v2805
  %v2807 = vsub.s32 4294967266, %v2802
  %v2808 = vadd.s32 %v2807, 127
  %v2809 = vshll.u32 %v2808, 23
  %v2810 = vor.u32 4788187, %v2809
  %v2811 = vand.u32 2147483647, %v2810
  %v2813 = vcvt.s32.f32 %v2806
  %v2814 = vmul.f32 %v2813, %v2811
  %v2815 = vxor.u32 %v2814, 2147483648
  %v2816 = vsel %vm2733, %v2815, %v2814
  %v2817 = vsub.s32 4, %v2793
  %v2818 = vsel %vm2733, %v2817, %v2793
  %v2819 = vsel %vm2732, %v1604, %v2816
  %v2820 = vsel %vm2732, 0, %v2818
  %v2821 = vcosq.f32.pop %v2819
  %v2822 = vsinq.f32.pop %v2819
  %vm2823 = vweird.f32 %v1604
  %v2824 = vadd.s32 %v2820, 3
  %v2825 = vand.u32 %v2824, 3
  %vm2826 = vcmp.lt.s32.totalorder %v2825, 2
  %vm2827 = vcmp.eq.s32.totalorder %v2825, 0
  %v2828 = vxor.u32 %v2822, 2147483648
  %v2829 = vsel %vm2827, %v2821, %v2828
  %vm2830 = vcmp.eq.s32.totalorder %v2825, 2
  %v2831 = vxor.u32 %v2821, 2147483648
  %v2832 = vsel %vm2830, %v2831, %v2822
  %v2833 = vsel %vm2826, %v2829, %v2832
  %v2834 = vsel %vm2823, nan, %v2833
  %v2835 = vand.u32 2147483647, %v1688
  %vm2836 = vcmp.le.f32.partialorder %v2835, 0.7853982
  %vm2837 = vcmp.lt.s32.totalorder %v1688, 0
  %v2838 = vand.u32 %v1688, 2139095040
  %v2839 = vshrl.u32 %v2838, 23
  %v2840 = vsub.s32 %v2839, 127
  %v2841 = vand.u32 2147483647, %v1688
  %v2842 = vand.u32 %v2841, 8388607
  %v2843 = vor.u32 %v2842, 8388608
  %v2844 = vsub.s32 0, %v2843
  %v2845 = vadd.s32 %v2840, 1
  %vm2846 = vcmp.gt.s32.totalorder %v2845, 0
  %v2847 = vsel %vm2846, %v2845, 0
  %v2848 = vshrl.u32 %v2847, 5
  %v2849 = vand.u32 %v2847, 31
  %v2850 = vsub.s32 32, %v2849
  %v2851 = vshrl.u32 683565275, %v2850
  %v2852 = vshll.u32 683565275, %v2849
  %v2853 = vshrl.u32 2475754826, %v2850
  %v2854 = vor.u32 %v2852, %v2853
  %v2855 = vshll.u32 2475754826, %v2849
  %v2856 = vshrl.u32 2131351028, %v2850
  %v2857 = vor.u32 %v2855, %v2856
  %v2858 = vshll.u32 2131351028, %v2849
  %v2859 = vshrl.u32 2102212464, %v2850
  %v2860 = vor.u32 %v2858, %v2859
  %v2861 = vshll.u32 2102212464, %v2849
  %v2862 = vshrl.u32 920167782, %v2850
  %v2863 = vor.u32 %v2861, %v2862
  %v2864 = vshll.u32 920167782, %v2849
  %v2865 = vshrl.u32 1326507024, %v2850
  %v2866 = vor.u32 %v2864, %v2865
  %vm2867 = vcmp.lt.s32.totalorder %v2848, 1
  %vm2868 = vcmp.lt.s32.totalorder %v2848, 2
  %vm2869 = vcmp.lt.s32.totalorder %v2848, 3
  %vm2870 = vcmp.lt.s32.totalorder %v2848, 4
  %v2871 = vsel %vm2867, %v2851, %v2854
  %v2872 = vsel %vm2870, %v2860, 2102212464
  %v2873 = vsel %vm2869, %v2857, %v2872
  %v2874 = vsel %vm2868, %v2871, %v2873
  %v2875 = vsel %vm2867, %v2854, %v2857
  %v2876 = vsel %vm2870, %v2863, 920167782
  %v2877 = vsel %vm2869, %v2860, %v2876
  %v2878 = vsel %vm2868, %v2875, %v2877
  %v2879 = vsel %vm2867, %v2857, %v2860
  %v2880 = vsel %vm2870, %v2866, 1326507024
  %v2881 = vsel %vm2869, %v2863, %v2880
  %v2882 = vsel %vm2868, %v2879, %v2881
  %v2883 = vshll.u32 %v2843, 8
  %v2884 = vmul.u32.u64.compose %v2883, %v2882
  %v2885 = vextract.low.u32 %v2884
  %v2886 = vextract.high.u32 %v2884
  %v2887 = vmul.u32.u64.compose %v2883, %v2878
  %v2888 = vextract.low.u32 %v2887
  %v2889 = vextract.high.u32 %v2887
  %v2890 = vmul.u32 %v2883, %v2874
  %v2891 = vadd.s32 %v2886, %v2888
  %vm2892 = vc.u32 %v2886, %v2888
  %v2893 = vadd.s32 %v2889, 1
  %v2894 = vsel %vm2892, %v2893, %v2889
  %v2895 = vadd.s32 %v2890, %v2894
  %v2896 = vadd.s32 %v2895, 536870912
  %v2897 = vshrl.u32 %v2896, 30
  %v2898 = vshll.u32 %v2897, 30
  %v2899 = vsub.s32 %v2895, %v2898
  %vm2900 = vcmp.lt.s32.totalorder %v2899, 0
  %v2901 = vsub.s32 0, %v2899
  %v2902 = vsel %vm2900, %v2901, %v2899
  %v2903 = vclz %v2902
  %v2904 = vsub.s32 %v2903, 2
  %vm2905 = vcmp.gt.s32.totalorder 0, %v2904
  %v2906 = vsel %vm2905, 0, %v2904
  %v2907 = vsub.s32 32, %v2906
  %v2908 = vshll.u32 %v2899, %v2906
  %v2909 = vshrl.u32 %v2891, %v2907
  %v2910 = vor.u32 %v2908, %v2909
  %v2911 = vsub.s32 4294967266, %v2906
  %v2912 = vadd.s32 %v2911, 127
  %v2913 = vshll.u32 %v2912, 23
  %v2914 = vor.u32 4788187, %v2913
  %v2915 = vand.u32 2147483647, %v2914
  %v2917 = vcvt.s32.f32 %v2910
  %v2918 = vmul.f32 %v2917, %v2915
  %v2919 = vxor.u32 %v2918, 2147483648
  %v2920 = vsel %vm2837, %v2919, %v2918
  %v2921 = vsub.s32 4, %v2897
  %v2922 = vsel %vm2837, %v2921, %v2897
  %v2923 = vsel %vm2836, %v1688, %v2920
  %v2924 = vsel %vm2836, 0, %v2922
  %v2925 = vcosq.f32.pop %v2923
  %v2926 = vsinq.f32.pop %v2923
  %vm2927 = vweird.f32 %v1688
  %v2928 = vadd.s32 %v2924, 3
  %v2929 = vand.u32 %v2928, 3
  %vm2930 = vcmp.lt.s32.totalorder %v2929, 2
  %vm2931 = vcmp.eq.s32.totalorder %v2929, 0
  %v2932 = vxor.u32 %v2926, 2147483648
  %v2933 = vsel %vm2931, %v2925, %v2932
  %vm2934 = vcmp.eq.s32.totalorder %v2929, 2
  %v2935 = vxor.u32 %v2925, 2147483648
  %v2936 = vsel %vm2934, %v2935, %v2926
  %v2937 = vsel %vm2930, %v2933, %v2936
  %v2938 = vsel %vm2927, nan, %v2937
  %v2939 = vld [vmem:[%s4] sm:$0x1]
  %v2940 = vld [vmem:[#allocation2] sm:$0x1]
  %2942 = vset.pattern.permute.xlu0 0
  %2943 = vperm.xlu0 %2942, %v2940
  %v2944 = vpop.permute.xlu0 %2943
  %v2946 = vlaneseq
  %v2947 = vshrl.u32 %v2946, 7
  %v2948 = vsub.s32 0, %v2947
  %v2949 = vrot.slane %v2944, %v2948
  %v2951 = vsel %vm1504, %v2939, 0
  %2953 = vmatprep.subr.mxu0 0.0
  %2954 = vmatpush1.msra.mxu0 0.0
  %2955 = vmatprep.subr.mxu0 0.0
  %2956 = vmatpush1.msra.mxu0 0.0
  %2957 = vmatprep.subr.mxu0 0.0
  %2958 = vmatpush1.msra.mxu0 0.0
  %2959 = vmatprep.subr.mxu0 0.0
  %2960 = vmatpush1.msra.mxu0 0.0
  %2961 = vmatprep.subr.mxu0 0.0
  %2962 = vmatpush1.msra.mxu0 0.0
  %2963 = vmatprep.subr.mxu0 0.0
  %2964 = vmatpush1.msra.mxu0 0.0
  %2965 = vmatprep.subr.mxu0 0.0
  %2966 = vmatpush1.msra.mxu0 0.0
  %2967 = vmatprep.subr.mxu0 0.0
  %2968 = vmatpush1.msra.mxu0 0.0
  %2969 = vmatprep.subr.mxu0 0.0
  %2970 = vmatpush1.msra.mxu0 0.0
  %2971 = vmatprep.subr.mxu0 0.0
  %2972 = vmatpush1.msra.mxu0 0.0
  %2973 = vmatprep.subr.mxu0 0.0
  %2974 = vmatpush1.msra.mxu0 0.0
  %2975 = vmatprep.subr.mxu0 0.0
  %2976 = vmatpush1.msra.mxu0 0.0
  %2977 = vmatprep.subr.mxu0 %v2834
  %2978 = vmatpush1.msra.mxu0 %v2730
  %2979 = vmatprep.subr.mxu0 %v2522
  %2980 = vmatpush1.msra.mxu0 %v2418
  %2981 = vmatprep.subr.mxu0 %v2210
  %2982 = vmatpush1.msra.mxu0 %v2106
  %2983 = vmatprep.subr.mxu0 %v1898
  %2984 = vmatpush1.msra.mxu0 %v1794
  %2985 = vmatprep.subr.mxu0 0.0
  %2986 = vmatpush2.msra.mxu0 0.0
  %2987 = vmatprep.subr.mxu0 0.0
  %2988 = vmatpush2.msra.mxu0 0.0
  %2989 = vmatprep.subr.mxu0 0.0
  %2990 = vmatpush2.msra.mxu0 0.0
  %2991 = vmatprep.subr.mxu0 0.0
  %2992 = vmatpush2.msra.mxu0 0.0
  %2993 = vmatprep.subr.mxu0 0.0
  %2994 = vmatpush2.msra.mxu0 0.0
  %2995 = vmatprep.subr.mxu0 0.0
  %2996 = vmatpush2.msra.mxu0 0.0
  %2997 = vmatprep.subr.mxu0 0.0
  %2998 = vmatpush2.msra.mxu0 0.0
  %2999 = vmatprep.subr.mxu0 0.0
  %3000 = vmatpush2.msra.mxu0 0.0
  %3001 = vmatprep.subr.mxu0 0.0
  %3002 = vmatpush2.msra.mxu0 0.0
  %3003 = vmatprep.subr.mxu0 0.0
  %3004 = vmatpush2.msra.mxu0 0.0
  %3005 = vmatprep.subr.mxu0 0.0
  %3006 = vmatpush2.msra.mxu0 0.0
  %3007 = vmatprep.subr.mxu0 0.0
  %3008 = vmatpush2.msra.mxu0 0.0
  %3009 = vmatprep.subr.mxu0 0.0
  %3010 = vmatpush2.msra.mxu0 0.0
  %3011 = vmatprep.subr.mxu0 0.0
  %3012 = vmatpush2.msra.mxu0 0.0
  %3013 = vmatprep.subr.mxu0 0.0
  %3014 = vmatpush2.msra.mxu0 0.0
  %3015 = vmatprep.subr.mxu0 0.0
  %3016 = vmatpush2.msra.mxu0 0.0
  %3017 = vmatprep.mubr.f32.mxu0 0.0
  %3018 = vmatmul.mubr.f32.gmra.mxu0 %v2951
  %v3019 = vpop.f32.mrf.mxu0
  %v3020 = vadd.f32 %v2949, %v3019
  %v3021 = vpop.f32.mrf.mxu0
  %v3022 = vadd.f32 %v2949, %v3021
  %3023 = vdwg.mxu0
  %3024 = vmatprep.subr.mxu0 0.0
  %3025 = vmatpush1.msra.mxu0 0.0
  %3026 = vmatprep.subr.mxu0 0.0
  %3027 = vmatpush1.msra.mxu0 0.0
  %3028 = vmatprep.subr.mxu0 0.0
  %3029 = vmatpush1.msra.mxu0 0.0
  %3030 = vmatprep.subr.mxu0 0.0
  %3031 = vmatpush1.msra.mxu0 0.0
  %3032 = vmatprep.subr.mxu0 0.0
  %3033 = vmatpush1.msra.mxu0 0.0
  %3034 = vmatprep.subr.mxu0 0.0
  %3035 = vmatpush1.msra.mxu0 0.0
  %3036 = vmatprep.subr.mxu0 0.0
  %3037 = vmatpush1.msra.mxu0 0.0
  %3038 = vmatprep.subr.mxu0 0.0
  %3039 = vmatpush1.msra.mxu0 0.0
  %3040 = vmatprep.subr.mxu0 0.0
  %3041 = vmatpush1.msra.mxu0 0.0
  %3042 = vmatprep.subr.mxu0 0.0
  %3043 = vmatpush1.msra.mxu0 0.0
  %3044 = vmatprep.subr.mxu0 0.0
  %3045 = vmatpush1.msra.mxu0 0.0
  %3046 = vmatprep.subr.mxu0 0.0
  %3047 = vmatpush1.msra.mxu0 0.0
  %3048 = vmatprep.subr.mxu0 0.0
  %3049 = vmatpush1.msra.mxu0 %v2938
  %3050 = vmatprep.subr.mxu0 0.0
  %3051 = vmatpush1.msra.mxu0 %v2626
  %3052 = vmatprep.subr.mxu0 0.0
  %3053 = vmatpush1.msra.mxu0 %v2314
  %3054 = vmatprep.subr.mxu0 0.0
  %3055 = vmatpush1.msra.mxu0 %v2002
  %3056 = vmatprep.subr.mxu0 0.0
  %3057 = vmatpush2.msra.mxu0 0.0
  %3058 = vmatprep.subr.mxu0 0.0
  %3059 = vmatpush2.msra.mxu0 0.0
  %3060 = vmatprep.subr.mxu0 0.0
  %3061 = vmatpush2.msra.mxu0 0.0
  %3062 = vmatprep.subr.mxu0 0.0
  %3063 = vmatpush2.msra.mxu0 0.0
  %3064 = vmatprep.subr.mxu0 0.0
  %3065 = vmatpush2.msra.mxu0 0.0
  %3066 = vmatprep.subr.mxu0 0.0
  %3067 = vmatpush2.msra.mxu0 0.0
  %3068 = vmatprep.subr.mxu0 0.0
  %3069 = vmatpush2.msra.mxu0 0.0
  %3070 = vmatprep.subr.mxu0 0.0
  %3071 = vmatpush2.msra.mxu0 0.0
  %3072 = vmatprep.subr.mxu0 0.0
  %3073 = vmatpush2.msra.mxu0 0.0
  %3074 = vmatprep.subr.mxu0 0.0
  %3075 = vmatpush2.msra.mxu0 0.0
  %3076 = vmatprep.subr.mxu0 0.0
  %3077 = vmatpush2.msra.mxu0 0.0
  %3078 = vmatprep.subr.mxu0 0.0
  %3079 = vmatpush2.msra.mxu0 0.0
  %3080 = vmatprep.subr.mxu0 0.0
  %3081 = vmatpush2.msra.mxu0 0.0
  %3082 = vmatprep.subr.mxu0 0.0
  %3083 = vmatpush2.msra.mxu0 0.0
  %3084 = vmatprep.subr.mxu0 0.0
  %3085 = vmatpush2.msra.mxu0 0.0
  %3086 = vmatprep.subr.mxu0 0.0
  %3087 = vmatpush2.msra.mxu0 0.0
  %3088 = vmatprep.mubr.f32.mxu0 0.0
  %3089 = vmatmul.mubr.f32.gmra.mxu0 %v2951
  %v3090 = vpop.f32.mrf.mxu0
  %v3091 = vadd.f32 %v2949, %v3090
  %v3092 = vpop.f32.mrf.mxu0
  %3093 = vdwg.mxu0
  %v3097 = vcombine.low %v3020, %v3022
  %v3099 = vunpack.c.l.s4 1966171168
  %v3100 = vunpack.c.0.s8 %v3099
  %v3101 = vlaneseq
  %v3102 = vshrl.u32 %v3101, 7
  %v3103 = vsub.s32 %v3100, %v3102
  %v3104 = vrot.slane %v3097, %v3103
  %v3106 = vunpack.c.l.s4 1966171168
  %v3107 = vunpack.c.0.s8 %v3106
  %v3108 = vlaneseq
  %v3109 = vshrl.u32 %v3108, 7
  %v3110 = vsub.s32 %v3107, %v3109
  %v3111 = vrot.slane %v3091, %v3110
  %v3112 = vcombine.low %v3104, %v3111
  %v3114 = vunpack.c.l.s4 1966171168
  %v3115 = vunpack.c.0.s8 %v3114
  %v3116 = vlaneseq
  %v3117 = vshrl.u32 %v3116, 7
  %v3118 = vsub.s32 %v3115, %v3117
  %v3119 = vrot.slane %v3112, %v3118
  %v3121 = vlaneseq
  %vm3122 = vcmp.ge.s32.totalorder %v3121, 0
  %vm3123 = vcmp.lt.s32.totalorder %v3121, 384
  %vm3124 = vmand %vm3122, %vm3123
  %3125 = vst.msk [vmem:[%s6] sm:$0x7] %vm3124, %v3119
  // Predicated region
  $region26: #{resop_forward.1} parent=0 // pred_check
    _
  $region27: #{resop_forward.1} parent=0 // pred_check_branch
    %3127 = sbr.rel (0) target = $region29
  $region28: #{resop_forward.1} parent=0 // pred_region
    _
  $region29: #{resop_forward.1} parent=0 // pred_fallthru
    _
  // Predicated region
  $region30: #{resop_forward.1} parent=0 // pred_check
    _
  $region31: #{resop_forward.1} parent=0 // pred_check_branch
    %3129 = sbr.rel (0) target = $region33
  $region32: #{resop_forward.1} parent=0 // pred_region
    _
  $region33: #{resop_forward.1} parent=0 // pred_fallthru
    _

</llo_original>
